<compile_context>
chip_gen: v6e
topology: v6e:2x2x1
jax: 0.10.0
libtpu: 0.0.40
codegen_flags: <defaults>
</compile_context>

<pallas_src>
import functools

import jax
import jax.numpy as jnp
import numpy as np
from jax.experimental import pallas as pl
from jax.experimental.pallas import tpu as pltpu


def _convlstm_kernel(convx_ref, wh_ref,
                     out_ref, hfin_ref, cfin_ref,
                     hbuf_ref,
                     *, seq_len, bs, length, hidden, ksize, pad_l, left):
    S, B, L, H, K = seq_len, bs, length, hidden, ksize
    O = 4 * H

    # h state + "same"-padding halo, zeroed once: the zero halo doubles as the
    # zero initial hidden state, so there is no per-step pad/concat copy.
    hbuf_ref[...] = jnp.zeros_like(hbuf_ref)

    # Lane masks for the fused gate activation (hoisted out of the recurrence).
    lane = jax.lax.broadcasted_iota(jnp.int32, (B * L, O), 1)
    is_g = lane >= 3 * H                        # candidate-gate (tanh) lanes
    gate_scale = jnp.where(is_g, 2.0, 1.0)      # tanh(x) = 2*sigmoid(2x) - 1

    def step(t, c):
        # im2col window of h read straight from the halo scratch (K statically
        # shifted views).  The (B, L, K*H)->(B*L, K*H) merge keeps the last dim
        # and L % 8 == 0, so it is a tile-aligned no-op (no VMEM relayout).
        win_h = jnp.concatenate(
            [hbuf_ref[:, left - pad_l + k: left - pad_l + k + L, :]
             for k in range(K)], axis=-1)                        # (B, L, K*H)
        win_h = win_h.reshape(B * L, K * H).astype(jnp.bfloat16)

        # Single bf16 MXU dot per step; f32 accumulation; hoisted conv_x added.
        conv = convx_ref[t].reshape(B * L, O) + jnp.dot(
            win_h, wh_ref[...], preferred_element_type=jnp.float32)

        # One full-width sigmoid on the EUP; tanh lanes via 2*sigmoid(2x) - 1.
        s = jax.nn.sigmoid(conv * gate_scale)
        act = jnp.where(is_g, s + s - 1.0, s)
        i_g = act[:, 0:H]
        f_g = act[:, H:2 * H]
        o_g = act[:, 2 * H:3 * H]
        g_g = act[:, 3 * H:4 * H]

        c_next = f_g * c + i_g * g_g
        h_next = o_g * jnp.tanh(c_next)

        hbuf_ref[:, left:left + L, :] = h_next.reshape(B, L, H)   # aligned store
        # Per-step store directly into the final (B, S, L, H) layout.
        out_ref[:, pl.ds(t, 1)] = (
            h_next.reshape(B, 1, L, H).astype(out_ref.dtype))
        return c_next

    c_fin = jax.lax.fori_loop(0, S, step,
                              jnp.zeros((B * L, H), jnp.float32),
                              unroll=True if S <= 16 else 4)

    hfin_ref[...] = hbuf_ref[:, left:left + L, :].astype(hfin_ref.dtype)
    cfin_ref[...] = c_fin.reshape(B, L, H).astype(cfin_ref.dtype)


def conv_lstm_pallas(x, w, b, *, batch_shards=1):
    """x: (B, S, L, F)   w: (K, Cin, 4H) with Cin=F+H   b: (1, 4H).

    Returns (output (B, S, L, H), h_final (B, L, H), c_final (B, L, H)).
    batch_shards: grid size over batch ("parallel"); set 2 on v7x to use both
    TensorCores.  Default 1 = single invocation (best on 1-TC v5e/v6e).
    """
    B, S, L, F = x.shape
    K, Cin, O = w.shape
    H = O // 4
    assert Cin == F + H
    assert B % batch_shards == 0
    Bs = B // batch_shards
    pad_l = (K - 1) // 2
    pad_r = K - 1 - pad_l
    left = ((pad_l + 7) // 8) * 8   # sublane-aligned left halo in the h scratch

    # Weight split: x-path stays with XLA (hoisted phase 1); h-path (bf16 MXU
    # operand) goes to the kernel.  Row index = k*C + c, matching the window
    # concatenation order.
    wx = w[:, :F, :].reshape(K * F, O).astype(jnp.float32)
    wh = w[:, F:, :].reshape(K * H, O).astype(jnp.bfloat16)

    # Phase 1 hoisted to XLA: input-side conv for ALL timesteps + bias, as one
    # dense dot producing a lane-dense (S, B, L, 4H) slab for the kernel.
    xf = x.astype(jnp.float32)
    x_pad = jnp.pad(xf, ((0, 0), (0, 0), (pad_l, pad_r), (0, 0)))
    win_x = jnp.concatenate([x_pad[:, :, k:k + L, :] for k in range(K)],
                            axis=-1)                              # (B,S,L,K*F)
    conv_x = jnp.einsum('bslc,co->sblo', win_x, wx) + b.reshape(1, 1, 1, O)

    kernel = functools.partial(
        _convlstm_kernel, seq_len=S, bs=Bs, length=L, hidden=H,
        ksize=K, pad_l=pad_l, left=left)

    out_shapes = (
        jax.ShapeDtypeStruct((B, S, L, H), x.dtype),   # all h, final layout
        jax.ShapeDtypeStruct((B, L, H), x.dtype),      # final h
        jax.ShapeDtypeStruct((B, L, H), x.dtype),      # final c
    )

    # Scaling guardrail: at these shapes everything fits VMEM trivially; if
    # S/B/L grow, move S onto a streamed grid axis (keep h/c/hbuf as persistent
    # scratch across an "arbitrary" axis) instead of growing this single block.
    grid_spec = pltpu.PrefetchScalarGridSpec(
        num_scalar_prefetch=0,
        grid=(batch_shards,),
        in_specs=[
            pl.BlockSpec((S, Bs, L, O), lambda g: (0, g, 0, 0)),
            pl.BlockSpec((K * H, O), lambda g: (0, 0)),
        ],
        out_specs=[
            pl.BlockSpec((Bs, S, L, H), lambda g: (g, 0, 0, 0)),
            pl.BlockSpec((Bs, L, H), lambda g: (g, 0, 0)),
            pl.BlockSpec((Bs, L, H), lambda g: (g, 0, 0)),
        ],
        scratch_shapes=[
            pltpu.VMEM((Bs, left + L + pad_r, H), jnp.float32),  # h state + halo
        ],
    )

    out, h_fin, c_fin = pl.pallas_call(
        kernel,
        out_shape=out_shapes,
        grid_spec=grid_spec,
        compiler_params=pltpu.CompilerParams(
            dimension_semantics=("parallel",),
            vmem_limit_bytes=32 * 1024 * 1024),
    )(conv_x, wh)

    return out, h_fin, c_fin


def conv_lstm_ref(x, w, b):
    """Pure-JAX reference with identical semantics (validation)."""
    B, S, L, F = x.shape
    K, Cin, O = w.shape
    H = O // 4
    pad_l = (K - 1) // 2
    pad_r = K - 1 - pad_l
    h = jnp.zeros((B, L, H), jnp.float32)
    c = jnp.zeros((B, L, H), jnp.float32)
    outs = []
    for t in range(S):
        comb = jnp.concatenate([x[:, t].astype(jnp.float32), h], axis=-1)
        padded = jnp.pad(comb, ((0, 0), (pad_l, pad_r), (0, 0)))
        conv = jnp.zeros((B, L, O), jnp.float32)
        for k in range(K):
            conv = conv + jnp.einsum("blc,co->blo", padded[:, k:k + L, :], w[k])
        conv = conv + b.reshape(1, 1, O)
        i_g = jax.nn.sigmoid(conv[..., 0:H])
        f_g = jax.nn.sigmoid(conv[..., H:2 * H])
        o_g = jax.nn.sigmoid(conv[..., 2 * H:3 * H])
        g_g = jnp.tanh(conv[..., 3 * H:4 * H])
        c = f_g * c + i_g * g_g
        h = o_g * jnp.tanh(c)
        outs.append(h[:, None])
    out = jnp.concatenate(outs, axis=1).astype(x.dtype)
    return out, (h.astype(x.dtype), c.astype(x.dtype))


if __name__ == "__main__":
    # Shapes consistent with ConvLSTM.forward:
    #   input_tensor: (batch=2, seq_len=8, time_step=16, feature_num=4)
    #   hidden_size=32, kernel_size=3 (odd -> symmetric "same" padding)
    B, S, L, F = 2, 8, 16, 4
    H, K = 32, 3
    Cin, O = F + H, 4 * H

    key = jax.random.PRNGKey(0)
    kx, kw, kb = jax.random.split(key, 3)

    x = jax.random.normal(kx, (B, S, L, F), dtype=jnp.float32)

    # Deterministic init matching nn.Conv1d uniform(-bound, bound), bound = 1/sqrt(Cin*K)
    bound = 1.0 / np.sqrt(Cin * K)
    w = jax.random.uniform(kw, (K, Cin, O), dtype=jnp.float32,
                           minval=-bound, maxval=bound)
    b = jax.random.uniform(kb, (1, O), dtype=jnp.float32,
                           minval=-bound, maxval=bound)

    out_r, (h_r, c_r) = conv_lstm_ref(x, w, b)

    # bf16 MXU operands on the recurrent path -> relaxed tolerance (state stays
    # f32, so drift over S=8 steps is bounded well below this).
    tol = dict(rtol=2e-2, atol=2e-2)

    # Default: single invocation (best for 1-TC v5e/v6e).
    fn1 = jax.jit(functools.partial(conv_lstm_pallas, batch_shards=1))
    out, h_fin, c_fin = jax.block_until_ready(fn1(x, w, b))
    np.testing.assert_allclose(np.asarray(out), np.asarray(out_r), **tol)
    np.testing.assert_allclose(np.asarray(h_fin), np.asarray(h_r), **tol)
    np.testing.assert_allclose(np.asarray(c_fin), np.asarray(c_r), **tol)
    assert out.shape == (B, S, L, H)
    assert h_fin.shape == (B, L, H) and c_fin.shape == (B, L, H)

    # Batch-sharded variant: "parallel" grid over batch.  On v7x this places one
    # batch element per TensorCore; on v5e/v6e it simply runs serially (correct,
    # just not the default for them).
    fn2 = jax.jit(functools.partial(conv_lstm_pallas, batch_shards=2))
    out2, h2, c2 = jax.block_until_ready(fn2(x, w, b))
    np.testing.assert_allclose(np.asarray(out2), np.asarray(out_r), **tol)
    np.testing.assert_allclose(np.asarray(h2), np.asarray(h_r), **tol)
    np.testing.assert_allclose(np.asarray(c2), np.asarray(c_r), **tol)

    print("KERNEL_OK")
</pallas_src>

<mosaic_0001>
module attributes {stable_mosaic.version = 11 : i64} {
  func.func @_convlstm_kernel(%arg0: i32, %arg1: memref<8x2x16x128xf32, #tpu.memory_space<vmem>>, %arg2: memref<96x128xbf16, #tpu.memory_space<vmem>>, %arg3: memref<2x8x16x32xf32, #tpu.memory_space<vmem>>, %arg4: memref<2x16x32xf32, #tpu.memory_space<vmem>>, %arg5: memref<2x16x32xf32, #tpu.memory_space<vmem>>, %arg6: memref<2x25x32xf32, #tpu.memory_space<vmem>>) attributes {dimension_semantics = [#tpu.dimension_semantics<parallel>], iteration_bounds = array<i64: 1>, scalar_prefetch = 0 : i64, scratch_operands = 1 : i64, tpu.core_type = #tpu.core_type<tc>, window_params = [{transform_indices = @transform_0, window_bounds = array<i64: 8, 2, 16, 128>}, {pipeline_mode = #tpu.pipeline_mode<synchronous>, transform_indices = @transform_1, window_bounds = array<i64: 96, 128>}, {transform_indices = @transform_2, window_bounds = array<i64: 2, 8, 16, 32>}, {transform_indices = @transform_3, window_bounds = array<i64: 2, 16, 32>}, {transform_indices = @transform_4, window_bounds = array<i64: 2, 16, 32>}]} {
    %cst = arith.constant 0.000000e+00 : f32
    %0 = vector.broadcast %cst : f32 to vector<2x25x32xf32>
    %c0 = arith.constant 0 : index
    %c0_0 = arith.constant 0 : index
    %c0_1 = arith.constant 0 : index
    %1 = vector.load %arg6[%c0, %c0_0, %c0_1] : memref<2x25x32xf32, #tpu.memory_space<vmem>>, vector<2x25x32xf32>
    tpu.vector_store %arg6[%c0, %c0_0, %c0_1], %0 {strides = array<i32>} : memref<2x25x32xf32, #tpu.memory_space<vmem>>, vector<2x25x32xf32>,
    %2 = tpu.iota {dimensions = array<i32: 1>} : vector<32x128xi32>
    %c96_i32 = arith.constant 96 : i32
    %3 = vector.broadcast %c96_i32 : i32 to vector<32x128xi32>
    %4 = arith.cmpi sge, %2, %3 : vector<32x128xi32>
    %cst_2 = arith.constant 2.000000e+00 : f32
    %cst_3 = arith.constant 1.000000e+00 : f32
    %5 = vector.broadcast %cst_2 : f32 to vector<32x128xf32>
    %6 = vector.broadcast %cst_3 : f32 to vector<32x128xf32>
    %7 = arith.select %4, %5, %6 : vector<32x128xi1>, vector<32x128xf32>
    %cst_4 = arith.constant 0.000000e+00 : f32
    %8 = vector.broadcast %cst_4 : f32 to vector<32x32xf32>
    %c0_i32 = arith.constant 0 : i32
    %c0_5 = arith.constant 0 : index
    %c7 = arith.constant 7 : index
    %c0_6 = arith.constant 0 : index
    %9 = vector.load %arg6[%c0_5, %c7, %c0_6] : memref<2x25x32xf32, #tpu.memory_space<vmem>>, vector<2x16x32xf32>
    %c0_7 = arith.constant 0 : index
    %c8 = arith.constant 8 : index
    %c0_8 = arith.constant 0 : index
    %10 = vector.load %arg6[%c0_7, %c8, %c0_8] : memref<2x25x32xf32, #tpu.memory_space<vmem>>, vector<2x16x32xf32>
    %c0_9 = arith.constant 0 : index
    %c9 = arith.constant 9 : index
    %c0_10 = arith.constant 0 : index
    %11 = vector.load %arg6[%c0_9, %c9, %c0_10] : memref<2x25x32xf32, #tpu.memory_space<vmem>>, vector<2x16x32xf32>
    %12 = tpu.concatenate %9, %10, %11 in 2 : vector<2x16x32xf32>, vector<2x16x32xf32>, vector<2x16x32xf32> -> vector<2x16x96xf32>
    %13 = vector.shape_cast %12 : vector<2x16x96xf32> to vector<32x96xf32>
    %14 = arith.truncf %13 : vector<32x96xf32> to vector<32x96xbf16>
    %15 = arith.index_cast %c0_i32 : i32 to index
    %c0_11 = arith.constant 0 : index
    %c0_12 = arith.constant 0 : index
    %c0_13 = arith.constant 0 : index
    %16 = vector.load %arg1[%15, %c0_11, %c0_12, %c0_13] : memref<8x2x16x128xf32, #tpu.memory_space<vmem>>, vector<1x2x16x128xf32>
    %17 = vector.shape_cast %16 : vector<1x2x16x128xf32> to vector<2x16x128xf32>
    %18 = vector.shape_cast %17 : vector<2x16x128xf32> to vector<32x128xf32>
    %c0_14 = arith.constant 0 : index
    %c0_15 = arith.constant 0 : index
    %19 = vector.load %arg2[%c0_14, %c0_15] : memref<96x128xbf16, #tpu.memory_space<vmem>>, vector<96x128xbf16>
    %cst_16 = arith.constant dense<0.000000e+00> : vector<32x128xf32>
    %20 = tpu.matmul %14, %19, %cst_16 {dimension_numbers = #tpu.dot_dimension_numbers<[1], [0], [0], [1], [0, 0, 1, 1], [], []>} : vector<32x96xbf16>, vector<96x128xbf16>, vector<32x128xf32> -> vector<32x128xf32>
    %21 = arith.addf %18, %20 : vector<32x128xf32>
    %22 = arith.mulf %21, %7 : vector<32x128xf32>
    %23 = arith.negf %22 : vector<32x128xf32>
    %24 = math.exp %23 : vector<32x128xf32>
    %cst_17 = arith.constant 1.000000e+00 : f32
    %25 = vector.broadcast %cst_17 : f32 to vector<32x128xf32>
    %26 = arith.addf %25, %24 : vector<32x128xf32>
    %27 = arith.divf %25, %26 : vector<32x128xf32>
    %28 = arith.addf %27, %27 : vector<32x128xf32>
    %cst_18 = arith.constant 1.000000e+00 : f32
    %29 = vector.broadcast %cst_18 : f32 to vector<32x128xf32>
    %30 = arith.subf %28, %29 : vector<32x128xf32>
    %31 = arith.select %4, %30, %27 : vector<32x128xi1>, vector<32x128xf32>
    %32 = vector.extract_strided_slice %31 {offsets = [0, 0], sizes = [32, 32], strides = [1, 1]} : vector<32x128xf32> to vector<32x32xf32>
    %33 = vector.extract_strided_slice %31 {offsets = [0, 32], sizes = [32, 32], strides = [1, 1]} : vector<32x128xf32> to vector<32x32xf32>
    %34 = vector.extract_strided_slice %31 {offsets = [0, 64], sizes = [32, 32], strides = [1, 1]} : vector<32x128xf32> to vector<32x32xf32>
    %35 = vector.extract_strided_slice %31 {offsets = [0, 96], sizes = [32, 32], strides = [1, 1]} : vector<32x128xf32> to vector<32x32xf32>
    %36 = arith.mulf %33, %8 : vector<32x32xf32>
    %37 = arith.mulf %32, %35 : vector<32x32xf32>
    %38 = arith.addf %36, %37 : vector<32x32xf32>
    %39 = math.tanh %38 : vector<32x32xf32>
    %40 = arith.mulf %34, %39 : vector<32x32xf32>
    %41 = vector.shape_cast %40 : vector<32x32xf32> to vector<2x16x32xf32>
    %c0_19 = arith.constant 0 : index
    %c8_20 = arith.constant 8 : index
    %c0_21 = arith.constant 0 : index
    %42 = vector.load %arg6[%c0_19, %c8_20, %c0_21] : memref<2x25x32xf32, #tpu.memory_space<vmem>>, vector<2x16x32xf32>
    tpu.vector_store %arg6[%c0_19, %c8_20, %c0_21], %41 {strides = array<i32>} : memref<2x25x32xf32, #tpu.memory_space<vmem>>, vector<2x16x32xf32>,
    %43 = vector.shape_cast %40 : vector<32x32xf32> to vector<2x1x16x32xf32>
    %c0_22 = arith.constant 0 : index
    %44 = arith.index_cast %c0_i32 : i32 to index
    %c0_23 = arith.constant 0 : index
    %c0_24 = arith.constant 0 : index
    %45 = vector.load %arg3[%c0_22, %44, %c0_23, %c0_24] : memref<2x8x16x32xf32, #tpu.memory_space<vmem>>, vector<2x1x16x32xf32>
    tpu.vector_store %arg3[%c0_22, %44, %c0_23, %c0_24], %43 {strides = array<i32>} : memref<2x8x16x32xf32, #tpu.memory_space<vmem>>, vector<2x1x16x32xf32>,
    %c1_i32 = arith.constant 1 : i32
    %c0_25 = arith.constant 0 : index
    %c7_26 = arith.constant 7 : index
    %c0_27 = arith.constant 0 : index
    %46 = vector.load %arg6[%c0_25, %c7_26, %c0_27] : memref<2x25x32xf32, #tpu.memory_space<vmem>>, vector<2x16x32xf32>
    %c0_28 = arith.constant 0 : index
    %c8_29 = arith.constant 8 : index
    %c0_30 = arith.constant 0 : index
    %47 = vector.load %arg6[%c0_28, %c8_29, %c0_30] : memref<2x25x32xf32, #tpu.memory_space<vmem>>, vector<2x16x32xf32>
    %c0_31 = arith.constant 0 : index
    %c9_32 = arith.constant 9 : index
    %c0_33 = arith.constant 0 : index
    %48 = vector.load %arg6[%c0_31, %c9_32, %c0_33] : memref<2x25x32xf32, #tpu.memory_space<vmem>>, vector<2x16x32xf32>
    %49 = tpu.concatenate %46, %47, %48 in 2 : vector<2x16x32xf32>, vector<2x16x32xf32>, vector<2x16x32xf32> -> vector<2x16x96xf32>
    %50 = vector.shape_cast %49 : vector<2x16x96xf32> to vector<32x96xf32>
    %51 = arith.truncf %50 : vector<32x96xf32> to vector<32x96xbf16>
    %52 = arith.index_cast %c1_i32 : i32 to index
    %c0_34 = arith.constant 0 : index
    %c0_35 = arith.constant 0 : index
    %c0_36 = arith.constant 0 : index
    %53 = vector.load %arg1[%52, %c0_34, %c0_35, %c0_36] : memref<8x2x16x128xf32, #tpu.memory_space<vmem>>, vector<1x2x16x128xf32>
    %54 = vector.shape_cast %53 : vector<1x2x16x128xf32> to vector<2x16x128xf32>
    %55 = vector.shape_cast %54 : vector<2x16x128xf32> to vector<32x128xf32>
    %c0_37 = arith.constant 0 : index
    %c0_38 = arith.constant 0 : index
    %56 = vector.load %arg2[%c0_37, %c0_38] : memref<96x128xbf16, #tpu.memory_space<vmem>>, vector<96x128xbf16>
    %cst_39 = arith.constant dense<0.000000e+00> : vector<32x128xf32>
    %57 = tpu.matmul %51, %56, %cst_39 {dimension_numbers = #tpu.dot_dimension_numbers<[1], [0], [0], [1], [0, 0, 1, 1], [], []>} : vector<32x96xbf16>, vector<96x128xbf16>, vector<32x128xf32> -> vector<32x128xf32>
    %58 = arith.addf %55, %57 : vector<32x128xf32>
    %59 = arith.mulf %58, %7 : vector<32x128xf32>
    %60 = arith.negf %59 : vector<32x128xf32>
    %61 = math.exp %60 : vector<32x128xf32>
    %cst_40 = arith.constant 1.000000e+00 : f32
    %62 = vector.broadcast %cst_40 : f32 to vector<32x128xf32>
    %63 = arith.addf %62, %61 : vector<32x128xf32>
    %64 = arith.divf %62, %63 : vector<32x128xf32>
    %65 = arith.addf %64, %64 : vector<32x128xf32>
    %cst_41 = arith.constant 1.000000e+00 : f32
    %66 = vector.broadcast %cst_41 : f32 to vector<32x128xf32>
    %67 = arith.subf %65, %66 : vector<32x128xf32>
    %68 = arith.select %4, %67, %64 : vector<32x128xi1>, vector<32x128xf32>
    %69 = vector.extract_strided_slice %68 {offsets = [0, 0], sizes = [32, 32], strides = [1, 1]} : vector<32x128xf32> to vector<32x32xf32>
    %70 = vector.extract_strided_slice %68 {offsets = [0, 32], sizes = [32, 32], strides = [1, 1]} : vector<32x128xf32> to vector<32x32xf32>
    %71 = vector.extract_strided_slice %68 {offsets = [0, 64], sizes = [32, 32], strides = [1, 1]} : vector<32x128xf32> to vector<32x32xf32>
    %72 = vector.extract_strided_slice %68 {offsets = [0, 96], sizes = [32, 32], strides = [1, 1]} : vector<32x128xf32> to vector<32x32xf32>
    %73 = arith.mulf %70, %38 : vector<32x32xf32>
    %74 = arith.mulf %69, %72 : vector<32x32xf32>
    %75 = arith.addf %73, %74 : vector<32x32xf32>
    %76 = math.tanh %75 : vector<32x32xf32>
    %77 = arith.mulf %71, %76 : vector<32x32xf32>
    %78 = vector.shape_cast %77 : vector<32x32xf32> to vector<2x16x32xf32>
    %c0_42 = arith.constant 0 : index
    %c8_43 = arith.constant 8 : index
    %c0_44 = arith.constant 0 : index
    %79 = vector.load %arg6[%c0_42, %c8_43, %c0_44] : memref<2x25x32xf32, #tpu.memory_space<vmem>>, vector<2x16x32xf32>
    tpu.vector_store %arg6[%c0_42, %c8_43, %c0_44], %78 {strides = array<i32>} : memref<2x25x32xf32, #tpu.memory_space<vmem>>, vector<2x16x32xf32>,
    %80 = vector.shape_cast %77 : vector<32x32xf32> to vector<2x1x16x32xf32>
    %c0_45 = arith.constant 0 : index
    %81 = arith.index_cast %c1_i32 : i32 to index
    %c0_46 = arith.constant 0 : index
    %c0_47 = arith.constant 0 : index
    %82 = vector.load %arg3[%c0_45, %81, %c0_46, %c0_47] : memref<2x8x16x32xf32, #tpu.memory_space<vmem>>, vector<2x1x16x32xf32>
    tpu.vector_store %arg3[%c0_45, %81, %c0_46, %c0_47], %80 {strides = array<i32>} : memref<2x8x16x32xf32, #tpu.memory_space<vmem>>, vector<2x1x16x32xf32>,
    %c2_i32 = arith.constant 2 : i32
    %c0_48 = arith.constant 0 : index
    %c7_49 = arith.constant 7 : index
    %c0_50 = arith.constant 0 : index
    %83 = vector.load %arg6[%c0_48, %c7_49, %c0_50] : memref<2x25x32xf32, #tpu.memory_space<vmem>>, vector<2x16x32xf32>
    %c0_51 = arith.constant 0 : index
    %c8_52 = arith.constant 8 : index
    %c0_53 = arith.constant 0 : index
    %84 = vector.load %arg6[%c0_51, %c8_52, %c0_53] : memref<2x25x32xf32, #tpu.memory_space<vmem>>, vector<2x16x32xf32>
    %c0_54 = arith.constant 0 : index
    %c9_55 = arith.constant 9 : index
    %c0_56 = arith.constant 0 : index
    %85 = vector.load %arg6[%c0_54, %c9_55, %c0_56] : memref<2x25x32xf32, #tpu.memory_space<vmem>>, vector<2x16x32xf32>
    %86 = tpu.concatenate %83, %84, %85 in 2 : vector<2x16x32xf32>, vector<2x16x32xf32>, vector<2x16x32xf32> -> vector<2x16x96xf32>
    %87 = vector.shape_cast %86 : vector<2x16x96xf32> to vector<32x96xf32>
    %88 = arith.truncf %87 : vector<32x96xf32> to vector<32x96xbf16>
    %89 = arith.index_cast %c2_i32 : i32 to index
    %c0_57 = arith.constant 0 : index
    %c0_58 = arith.constant 0 : index
    %c0_59 = arith.constant 0 : index
    %90 = vector.load %arg1[%89, %c0_57, %c0_58, %c0_59] : memref<8x2x16x128xf32, #tpu.memory_space<vmem>>, vector<1x2x16x128xf32>
    %91 = vector.shape_cast %90 : vector<1x2x16x128xf32> to vector<2x16x128xf32>
    %92 = vector.shape_cast %91 : vector<2x16x128xf32> to vector<32x128xf32>
    %c0_60 = arith.constant 0 : index
    %c0_61 = arith.constant 0 : index
    %93 = vector.load %arg2[%c0_60, %c0_61] : memref<96x128xbf16, #tpu.memory_space<vmem>>, vector<96x128xbf16>
    %cst_62 = arith.constant dense<0.000000e+00> : vector<32x128xf32>
    %94 = tpu.matmul %88, %93, %cst_62 {dimension_numbers = #tpu.dot_dimension_numbers<[1], [0], [0], [1], [0, 0, 1, 1], [], []>} : vector<32x96xbf16>, vector<96x128xbf16>, vector<32x128xf32> -> vector<32x128xf32>
    %95 = arith.addf %92, %94 : vector<32x128xf32>
    %96 = arith.mulf %95, %7 : vector<32x128xf32>
    %97 = arith.negf %96 : vector<32x128xf32>
    %98 = math.exp %97 : vector<32x128xf32>
    %cst_63 = arith.constant 1.000000e+00 : f32
    %99 = vector.broadcast %cst_63 : f32 to vector<32x128xf32>
    %100 = arith.addf %99, %98 : vector<32x128xf32>
    %101 = arith.divf %99, %100 : vector<32x128xf32>
    %102 = arith.addf %101, %101 : vector<32x128xf32>
    %cst_64 = arith.constant 1.000000e+00 : f32
    %103 = vector.broadcast %cst_64 : f32 to vector<32x128xf32>
    %104 = arith.subf %102, %103 : vector<32x128xf32>
    %105 = arith.select %4, %104, %101 : vector<32x128xi1>, vector<32x128xf32>
    %106 = vector.extract_strided_slice %105 {offsets = [0, 0], sizes = [32, 32], strides = [1, 1]} : vector<32x128xf32> to vector<32x32xf32>
    %107 = vector.extract_strided_slice %105 {offsets = [0, 32], sizes = [32, 32], strides = [1, 1]} : vector<32x128xf32> to vector<32x32xf32>
    %108 = vector.extract_strided_slice %105 {offsets = [0, 64], sizes = [32, 32], strides = [1, 1]} : vector<32x128xf32> to vector<32x32xf32>
    %109 = vector.extract_strided_slice %105 {offsets = [0, 96], sizes = [32, 32], strides = [1, 1]} : vector<32x128xf32> to vector<32x32xf32>
    %110 = arith.mulf %107, %75 : vector<32x32xf32>
    %111 = arith.mulf %106, %109 : vector<32x32xf32>
    %112 = arith.addf %110, %111 : vector<32x32xf32>
    %113 = math.tanh %112 : vector<32x32xf32>
    %114 = arith.mulf %108, %113 : vector<32x32xf32>
    %115 = vector.shape_cast %114 : vector<32x32xf32> to vector<2x16x32xf32>
    %c0_65 = arith.constant 0 : index
    %c8_66 = arith.constant 8 : index
    %c0_67 = arith.constant 0 : index
    %116 = vector.load %arg6[%c0_65, %c8_66, %c0_67] : memref<2x25x32xf32, #tpu.memory_space<vmem>>, vector<2x16x32xf32>
    tpu.vector_store %arg6[%c0_65, %c8_66, %c0_67], %115 {strides = array<i32>} : memref<2x25x32xf32, #tpu.memory_space<vmem>>, vector<2x16x32xf32>,
    %117 = vector.shape_cast %114 : vector<32x32xf32> to vector<2x1x16x32xf32>
    %c0_68 = arith.constant 0 : index
    %118 = arith.index_cast %c2_i32 : i32 to index
    %c0_69 = arith.constant 0 : index
    %c0_70 = arith.constant 0 : index
    %119 = vector.load %arg3[%c0_68, %118, %c0_69, %c0_70] : memref<2x8x16x32xf32, #tpu.memory_space<vmem>>, vector<2x1x16x32xf32>
    tpu.vector_store %arg3[%c0_68, %118, %c0_69, %c0_70], %117 {strides = array<i32>} : memref<2x8x16x32xf32, #tpu.memory_space<vmem>>, vector<2x1x16x32xf32>,
    %c3_i32 = arith.constant 3 : i32
    %c0_71 = arith.constant 0 : index
    %c7_72 = arith.constant 7 : index
    %c0_73 = arith.constant 0 : index
    %120 = vector.load %arg6[%c0_71, %c7_72, %c0_73] : memref<2x25x32xf32, #tpu.memory_space<vmem>>, vector<2x16x32xf32>
    %c0_74 = arith.constant 0 : index
    %c8_75 = arith.constant 8 : index
    %c0_76 = arith.constant 0 : index
    %121 = vector.load %arg6[%c0_74, %c8_75, %c0_76] : memref<2x25x32xf32, #tpu.memory_space<vmem>>, vector<2x16x32xf32>
    %c0_77 = arith.constant 0 : index
    %c9_78 = arith.constant 9 : index
    %c0_79 = arith.constant 0 : index
    %122 = vector.load %arg6[%c0_77, %c9_78, %c0_79] : memref<2x25x32xf32, #tpu.memory_space<vmem>>, vector<2x16x32xf32>
    %123 = tpu.concatenate %120, %121, %122 in 2 : vector<2x16x32xf32>, vector<2x16x32xf32>, vector<2x16x32xf32> -> vector<2x16x96xf32>
    %124 = vector.shape_cast %123 : vector<2x16x96xf32> to vector<32x96xf32>
    %125 = arith.truncf %124 : vector<32x96xf32> to vector<32x96xbf16>
    %126 = arith.index_cast %c3_i32 : i32 to index
    %c0_80 = arith.constant 0 : index
    %c0_81 = arith.constant 0 : index
    %c0_82 = arith.constant 0 : index
    %127 = vector.load %arg1[%126, %c0_80, %c0_81, %c0_82] : memref<8x2x16x128xf32, #tpu.memory_space<vmem>>, vector<1x2x16x128xf32>
    %128 = vector.shape_cast %127 : vector<1x2x16x128xf32> to vector<2x16x128xf32>
    %129 = vector.shape_cast %128 : vector<2x16x128xf32> to vector<32x128xf32>
    %c0_83 = arith.constant 0 : index
    %c0_84 = arith.constant 0 : index
    %130 = vector.load %arg2[%c0_83, %c0_84] : memref<96x128xbf16, #tpu.memory_space<vmem>>, vector<96x128xbf16>
    %cst_85 = arith.constant dense<0.000000e+00> : vector<32x128xf32>
    %131 = tpu.matmul %125, %130, %cst_85 {dimension_numbers = #tpu.dot_dimension_numbers<[1], [0], [0], [1], [0, 0, 1, 1], [], []>} : vector<32x96xbf16>, vector<96x128xbf16>, vector<32x128xf32> -> vector<32x128xf32>
    %132 = arith.addf %129, %131 : vector<32x128xf32>
    %133 = arith.mulf %132, %7 : vector<32x128xf32>
    %134 = arith.negf %133 : vector<32x128xf32>
    %135 = math.exp %134 : vector<32x128xf32>
    %cst_86 = arith.constant 1.000000e+00 : f32
    %136 = vector.broadcast %cst_86 : f32 to vector<32x128xf32>
    %137 = arith.addf %136, %135 : vector<32x128xf32>
    %138 = arith.divf %136, %137 : vector<32x128xf32>
    %139 = arith.addf %138, %138 : vector<32x128xf32>
    %cst_87 = arith.constant 1.000000e+00 : f32
    %140 = vector.broadcast %cst_87 : f32 to vector<32x128xf32>
    %141 = arith.subf %139, %140 : vector<32x128xf32>
    %142 = arith.select %4, %141, %138 : vector<32x128xi1>, vector<32x128xf32>
    %143 = vector.extract_strided_slice %142 {offsets = [0, 0], sizes = [32, 32], strides = [1, 1]} : vector<32x128xf32> to vector<32x32xf32>
    %144 = vector.extract_strided_slice %142 {offsets = [0, 32], sizes = [32, 32], strides = [1, 1]} : vector<32x128xf32> to vector<32x32xf32>
    %145 = vector.extract_strided_slice %142 {offsets = [0, 64], sizes = [32, 32], strides = [1, 1]} : vector<32x128xf32> to vector<32x32xf32>
    %146 = vector.extract_strided_slice %142 {offsets = [0, 96], sizes = [32, 32], strides = [1, 1]} : vector<32x128xf32> to vector<32x32xf32>
    %147 = arith.mulf %144, %112 : vector<32x32xf32>
    %148 = arith.mulf %143, %146 : vector<32x32xf32>
    %149 = arith.addf %147, %148 : vector<32x32xf32>
    %150 = math.tanh %149 : vector<32x32xf32>
    %151 = arith.mulf %145, %150 : vector<32x32xf32>
    %152 = vector.shape_cast %151 : vector<32x32xf32> to vector<2x16x32xf32>
    %c0_88 = arith.constant 0 : index
    %c8_89 = arith.constant 8 : index
    %c0_90 = arith.constant 0 : index
    %153 = vector.load %arg6[%c0_88, %c8_89, %c0_90] : memref<2x25x32xf32, #tpu.memory_space<vmem>>, vector<2x16x32xf32>
    tpu.vector_store %arg6[%c0_88, %c8_89, %c0_90], %152 {strides = array<i32>} : memref<2x25x32xf32, #tpu.memory_space<vmem>>, vector<2x16x32xf32>,
    %154 = vector.shape_cast %151 : vector<32x32xf32> to vector<2x1x16x32xf32>
    %c0_91 = arith.constant 0 : index
    %155 = arith.index_cast %c3_i32 : i32 to index
    %c0_92 = arith.constant 0 : index
    %c0_93 = arith.constant 0 : index
    %156 = vector.load %arg3[%c0_91, %155, %c0_92, %c0_93] : memref<2x8x16x32xf32, #tpu.memory_space<vmem>>, vector<2x1x16x32xf32>
    tpu.vector_store %arg3[%c0_91, %155, %c0_92, %c0_93], %154 {strides = array<i32>} : memref<2x8x16x32xf32, #tpu.memory_space<vmem>>, vector<2x1x16x32xf32>,
    %c4_i32 = arith.constant 4 : i32
    %c0_94 = arith.constant 0 : index
    %c7_95 = arith.constant 7 : index
    %c0_96 = arith.constant 0 : index
    %157 = vector.load %arg6[%c0_94, %c7_95, %c0_96] : memref<2x25x32xf32, #tpu.memory_space<vmem>>, vector<2x16x32xf32>
    %c0_97 = arith.constant 0 : index
    %c8_98 = arith.constant 8 : index
    %c0_99 = arith.constant 0 : index
    %158 = vector.load %arg6[%c0_97, %c8_98, %c0_99] : memref<2x25x32xf32, #tpu.memory_space<vmem>>, vector<2x16x32xf32>
    %c0_100 = arith.constant 0 : index
    %c9_101 = arith.constant 9 : index
    %c0_102 = arith.constant 0 : index
    %159 = vector.load %arg6[%c0_100, %c9_101, %c0_102] : memref<2x25x32xf32, #tpu.memory_space<vmem>>, vector<2x16x32xf32>
    %160 = tpu.concatenate %157, %158, %159 in 2 : vector<2x16x32xf32>, vector<2x16x32xf32>, vector<2x16x32xf32> -> vector<2x16x96xf32>
    %161 = vector.shape_cast %160 : vector<2x16x96xf32> to vector<32x96xf32>
    %162 = arith.truncf %161 : vector<32x96xf32> to vector<32x96xbf16>
    %163 = arith.index_cast %c4_i32 : i32 to index
    %c0_103 = arith.constant 0 : index
    %c0_104 = arith.constant 0 : index
    %c0_105 = arith.constant 0 : index
    %164 = vector.load %arg1[%163, %c0_103, %c0_104, %c0_105] : memref<8x2x16x128xf32, #tpu.memory_space<vmem>>, vector<1x2x16x128xf32>
    %165 = vector.shape_cast %164 : vector<1x2x16x128xf32> to vector<2x16x128xf32>
    %166 = vector.shape_cast %165 : vector<2x16x128xf32> to vector<32x128xf32>
    %c0_106 = arith.constant 0 : index
    %c0_107 = arith.constant 0 : index
    %167 = vector.load %arg2[%c0_106, %c0_107] : memref<96x128xbf16, #tpu.memory_space<vmem>>, vector<96x128xbf16>
    %cst_108 = arith.constant dense<0.000000e+00> : vector<32x128xf32>
    %168 = tpu.matmul %162, %167, %cst_108 {dimension_numbers = #tpu.dot_dimension_numbers<[1], [0], [0], [1], [0, 0, 1, 1], [], []>} : vector<32x96xbf16>, vector<96x128xbf16>, vector<32x128xf32> -> vector<32x128xf32>
    %169 = arith.addf %166, %168 : vector<32x128xf32>
    %170 = arith.mulf %169, %7 : vector<32x128xf32>
    %171 = arith.negf %170 : vector<32x128xf32>
    %172 = math.exp %171 : vector<32x128xf32>
    %cst_109 = arith.constant 1.000000e+00 : f32
    %173 = vector.broadcast %cst_109 : f32 to vector<32x128xf32>
    %174 = arith.addf %173, %172 : vector<32x128xf32>
    %175 = arith.divf %173, %174 : vector<32x128xf32>
    %176 = arith.addf %175, %175 : vector<32x128xf32>
    %cst_110 = arith.constant 1.000000e+00 : f32
    %177 = vector.broadcast %cst_110 : f32 to vector<32x128xf32>
    %178 = arith.subf %176, %177 : vector<32x128xf32>
    %179 = arith.select %4, %178, %175 : vector<32x128xi1>, vector<32x128xf32>
    %180 = vector.extract_strided_slice %179 {offsets = [0, 0], sizes = [32, 32], strides = [1, 1]} : vector<32x128xf32> to vector<32x32xf32>
    %181 = vector.extract_strided_slice %179 {offsets = [0, 32], sizes = [32, 32], strides = [1, 1]} : vector<32x128xf32> to vector<32x32xf32>
    %182 = vector.extract_strided_slice %179 {offsets = [0, 64], sizes = [32, 32], strides = [1, 1]} : vector<32x128xf32> to vector<32x32xf32>
    %183 = vector.extract_strided_slice %179 {offsets = [0, 96], sizes = [32, 32], strides = [1, 1]} : vector<32x128xf32> to vector<32x32xf32>
    %184 = arith.mulf %181, %149 : vector<32x32xf32>
    %185 = arith.mulf %180, %183 : vector<32x32xf32>
    %186 = arith.addf %184, %185 : vector<32x32xf32>
    %187 = math.tanh %186 : vector<32x32xf32>
    %188 = arith.mulf %182, %187 : vector<32x32xf32>
    %189 = vector.shape_cast %188 : vector<32x32xf32> to vector<2x16x32xf32>
    %c0_111 = arith.constant 0 : index
    %c8_112 = arith.constant 8 : index
    %c0_113 = arith.constant 0 : index
    %190 = vector.load %arg6[%c0_111, %c8_112, %c0_113] : memref<2x25x32xf32, #tpu.memory_space<vmem>>, vector<2x16x32xf32>
    tpu.vector_store %arg6[%c0_111, %c8_112, %c0_113], %189 {strides = array<i32>} : memref<2x25x32xf32, #tpu.memory_space<vmem>>, vector<2x16x32xf32>,
    %191 = vector.shape_cast %188 : vector<32x32xf32> to vector<2x1x16x32xf32>
    %c0_114 = arith.constant 0 : index
    %192 = arith.index_cast %c4_i32 : i32 to index
    %c0_115 = arith.constant 0 : index
    %c0_116 = arith.constant 0 : index
    %193 = vector.load %arg3[%c0_114, %192, %c0_115, %c0_116] : memref<2x8x16x32xf32, #tpu.memory_space<vmem>>, vector<2x1x16x32xf32>
    tpu.vector_store %arg3[%c0_114, %192, %c0_115, %c0_116], %191 {strides = array<i32>} : memref<2x8x16x32xf32, #tpu.memory_space<vmem>>, vector<2x1x16x32xf32>,
    %c5_i32 = arith.constant 5 : i32
    %c0_117 = arith.constant 0 : index
    %c7_118 = arith.constant 7 : index
    %c0_119 = arith.constant 0 : index
    %194 = vector.load %arg6[%c0_117, %c7_118, %c0_119] : memref<2x25x32xf32, #tpu.memory_space<vmem>>, vector<2x16x32xf32>
    %c0_120 = arith.constant 0 : index
    %c8_121 = arith.constant 8 : index
    %c0_122 = arith.constant 0 : index
    %195 = vector.load %arg6[%c0_120, %c8_121, %c0_122] : memref<2x25x32xf32, #tpu.memory_space<vmem>>, vector<2x16x32xf32>
    %c0_123 = arith.constant 0 : index
    %c9_124 = arith.constant 9 : index
    %c0_125 = arith.constant 0 : index
    %196 = vector.load %arg6[%c0_123, %c9_124, %c0_125] : memref<2x25x32xf32, #tpu.memory_space<vmem>>, vector<2x16x32xf32>
    %197 = tpu.concatenate %194, %195, %196 in 2 : vector<2x16x32xf32>, vector<2x16x32xf32>, vector<2x16x32xf32> -> vector<2x16x96xf32>
    %198 = vector.shape_cast %197 : vector<2x16x96xf32> to vector<32x96xf32>
    %199 = arith.truncf %198 : vector<32x96xf32> to vector<32x96xbf16>
    %200 = arith.index_cast %c5_i32 : i32 to index
    %c0_126 = arith.constant 0 : index
    %c0_127 = arith.constant 0 : index
    %c0_128 = arith.constant 0 : index
    %201 = vector.load %arg1[%200, %c0_126, %c0_127, %c0_128] : memref<8x2x16x128xf32, #tpu.memory_space<vmem>>, vector<1x2x16x128xf32>
    %202 = vector.shape_cast %201 : vector<1x2x16x128xf32> to vector<2x16x128xf32>
    %203 = vector.shape_cast %202 : vector<2x16x128xf32> to vector<32x128xf32>
    %c0_129 = arith.constant 0 : index
    %c0_130 = arith.constant 0 : index
    %204 = vector.load %arg2[%c0_129, %c0_130] : memref<96x128xbf16, #tpu.memory_space<vmem>>, vector<96x128xbf16>
    %cst_131 = arith.constant dense<0.000000e+00> : vector<32x128xf32>
    %205 = tpu.matmul %199, %204, %cst_131 {dimension_numbers = #tpu.dot_dimension_numbers<[1], [0], [0], [1], [0, 0, 1, 1], [], []>} : vector<32x96xbf16>, vector<96x128xbf16>, vector<32x128xf32> -> vector<32x128xf32>
    %206 = arith.addf %203, %205 : vector<32x128xf32>
    %207 = arith.mulf %206, %7 : vector<32x128xf32>
    %208 = arith.negf %207 : vector<32x128xf32>
    %209 = math.exp %208 : vector<32x128xf32>
    %cst_132 = arith.constant 1.000000e+00 : f32
    %210 = vector.broadcast %cst_132 : f32 to vector<32x128xf32>
    %211 = arith.addf %210, %209 : vector<32x128xf32>
    %212 = arith.divf %210, %211 : vector<32x128xf32>
    %213 = arith.addf %212, %212 : vector<32x128xf32>
    %cst_133 = arith.constant 1.000000e+00 : f32
    %214 = vector.broadcast %cst_133 : f32 to vector<32x128xf32>
    %215 = arith.subf %213, %214 : vector<32x128xf32>
    %216 = arith.select %4, %215, %212 : vector<32x128xi1>, vector<32x128xf32>
    %217 = vector.extract_strided_slice %216 {offsets = [0, 0], sizes = [32, 32], strides = [1, 1]} : vector<32x128xf32> to vector<32x32xf32>
    %218 = vector.extract_strided_slice %216 {offsets = [0, 32], sizes = [32, 32], strides = [1, 1]} : vector<32x128xf32> to vector<32x32xf32>
    %219 = vector.extract_strided_slice %216 {offsets = [0, 64], sizes = [32, 32], strides = [1, 1]} : vector<32x128xf32> to vector<32x32xf32>
    %220 = vector.extract_strided_slice %216 {offsets = [0, 96], sizes = [32, 32], strides = [1, 1]} : vector<32x128xf32> to vector<32x32xf32>
    %221 = arith.mulf %218, %186 : vector<32x32xf32>
    %222 = arith.mulf %217, %220 : vector<32x32xf32>
    %223 = arith.addf %221, %222 : vector<32x32xf32>
    %224 = math.tanh %223 : vector<32x32xf32>
    %225 = arith.mulf %219, %224 : vector<32x32xf32>
    %226 = vector.shape_cast %225 : vector<32x32xf32> to vector<2x16x32xf32>
    %c0_134 = arith.constant 0 : index
    %c8_135 = arith.constant 8 : index
    %c0_136 = arith.constant 0 : index
    %227 = vector.load %arg6[%c0_134, %c8_135, %c0_136] : memref<2x25x32xf32, #tpu.memory_space<vmem>>, vector<2x16x32xf32>
    tpu.vector_store %arg6[%c0_134, %c8_135, %c0_136], %226 {strides = array<i32>} : memref<2x25x32xf32, #tpu.memory_space<vmem>>, vector<2x16x32xf32>,
    %228 = vector.shape_cast %225 : vector<32x32xf32> to vector<2x1x16x32xf32>
    %c0_137 = arith.constant 0 : index
    %229 = arith.index_cast %c5_i32 : i32 to index
    %c0_138 = arith.constant 0 : index
    %c0_139 = arith.constant 0 : index
    %230 = vector.load %arg3[%c0_137, %229, %c0_138, %c0_139] : memref<2x8x16x32xf32, #tpu.memory_space<vmem>>, vector<2x1x16x32xf32>
    tpu.vector_store %arg3[%c0_137, %229, %c0_138, %c0_139], %228 {strides = array<i32>} : memref<2x8x16x32xf32, #tpu.memory_space<vmem>>, vector<2x1x16x32xf32>,
    %c6_i32 = arith.constant 6 : i32
    %c0_140 = arith.constant 0 : index
    %c7_141 = arith.constant 7 : index
    %c0_142 = arith.constant 0 : index
    %231 = vector.load %arg6[%c0_140, %c7_141, %c0_142] : memref<2x25x32xf32, #tpu.memory_space<vmem>>, vector<2x16x32xf32>
    %c0_143 = arith.constant 0 : index
    %c8_144 = arith.constant 8 : index
    %c0_145 = arith.constant 0 : index
    %232 = vector.load %arg6[%c0_143, %c8_144, %c0_145] : memref<2x25x32xf32, #tpu.memory_space<vmem>>, vector<2x16x32xf32>
    %c0_146 = arith.constant 0 : index
    %c9_147 = arith.constant 9 : index
    %c0_148 = arith.constant 0 : index
    %233 = vector.load %arg6[%c0_146, %c9_147, %c0_148] : memref<2x25x32xf32, #tpu.memory_space<vmem>>, vector<2x16x32xf32>
    %234 = tpu.concatenate %231, %232, %233 in 2 : vector<2x16x32xf32>, vector<2x16x32xf32>, vector<2x16x32xf32> -> vector<2x16x96xf32>
    %235 = vector.shape_cast %234 : vector<2x16x96xf32> to vector<32x96xf32>
    %236 = arith.truncf %235 : vector<32x96xf32> to vector<32x96xbf16>
    %237 = arith.index_cast %c6_i32 : i32 to index
    %c0_149 = arith.constant 0 : index
    %c0_150 = arith.constant 0 : index
    %c0_151 = arith.constant 0 : index
    %238 = vector.load %arg1[%237, %c0_149, %c0_150, %c0_151] : memref<8x2x16x128xf32, #tpu.memory_space<vmem>>, vector<1x2x16x128xf32>
    %239 = vector.shape_cast %238 : vector<1x2x16x128xf32> to vector<2x16x128xf32>
    %240 = vector.shape_cast %239 : vector<2x16x128xf32> to vector<32x128xf32>
    %c0_152 = arith.constant 0 : index
    %c0_153 = arith.constant 0 : index
    %241 = vector.load %arg2[%c0_152, %c0_153] : memref<96x128xbf16, #tpu.memory_space<vmem>>, vector<96x128xbf16>
    %cst_154 = arith.constant dense<0.000000e+00> : vector<32x128xf32>
    %242 = tpu.matmul %236, %241, %cst_154 {dimension_numbers = #tpu.dot_dimension_numbers<[1], [0], [0], [1], [0, 0, 1, 1], [], []>} : vector<32x96xbf16>, vector<96x128xbf16>, vector<32x128xf32> -> vector<32x128xf32>
    %243 = arith.addf %240, %242 : vector<32x128xf32>
    %244 = arith.mulf %243, %7 : vector<32x128xf32>
    %245 = arith.negf %244 : vector<32x128xf32>
    %246 = math.exp %245 : vector<32x128xf32>
    %cst_155 = arith.constant 1.000000e+00 : f32
    %247 = vector.broadcast %cst_155 : f32 to vector<32x128xf32>
    %248 = arith.addf %247, %246 : vector<32x128xf32>
    %249 = arith.divf %247, %248 : vector<32x128xf32>
    %250 = arith.addf %249, %249 : vector<32x128xf32>
    %cst_156 = arith.constant 1.000000e+00 : f32
    %251 = vector.broadcast %cst_156 : f32 to vector<32x128xf32>
    %252 = arith.subf %250, %251 : vector<32x128xf32>
    %253 = arith.select %4, %252, %249 : vector<32x128xi1>, vector<32x128xf32>
    %254 = vector.extract_strided_slice %253 {offsets = [0, 0], sizes = [32, 32], strides = [1, 1]} : vector<32x128xf32> to vector<32x32xf32>
    %255 = vector.extract_strided_slice %253 {offsets = [0, 32], sizes = [32, 32], strides = [1, 1]} : vector<32x128xf32> to vector<32x32xf32>
    %256 = vector.extract_strided_slice %253 {offsets = [0, 64], sizes = [32, 32], strides = [1, 1]} : vector<32x128xf32> to vector<32x32xf32>
    %257 = vector.extract_strided_slice %253 {offsets = [0, 96], sizes = [32, 32], strides = [1, 1]} : vector<32x128xf32> to vector<32x32xf32>
    %258 = arith.mulf %255, %223 : vector<32x32xf32>
    %259 = arith.mulf %254, %257 : vector<32x32xf32>
    %260 = arith.addf %258, %259 : vector<32x32xf32>
    %261 = math.tanh %260 : vector<32x32xf32>
    %262 = arith.mulf %256, %261 : vector<32x32xf32>
    %263 = vector.shape_cast %262 : vector<32x32xf32> to vector<2x16x32xf32>
    %c0_157 = arith.constant 0 : index
    %c8_158 = arith.constant 8 : index
    %c0_159 = arith.constant 0 : index
    %264 = vector.load %arg6[%c0_157, %c8_158, %c0_159] : memref<2x25x32xf32, #tpu.memory_space<vmem>>, vector<2x16x32xf32>
    tpu.vector_store %arg6[%c0_157, %c8_158, %c0_159], %263 {strides = array<i32>} : memref<2x25x32xf32, #tpu.memory_space<vmem>>, vector<2x16x32xf32>,
    %265 = vector.shape_cast %262 : vector<32x32xf32> to vector<2x1x16x32xf32>
    %c0_160 = arith.constant 0 : index
    %266 = arith.index_cast %c6_i32 : i32 to index
    %c0_161 = arith.constant 0 : index
    %c0_162 = arith.constant 0 : index
    %267 = vector.load %arg3[%c0_160, %266, %c0_161, %c0_162] : memref<2x8x16x32xf32, #tpu.memory_space<vmem>>, vector<2x1x16x32xf32>
    tpu.vector_store %arg3[%c0_160, %266, %c0_161, %c0_162], %265 {strides = array<i32>} : memref<2x8x16x32xf32, #tpu.memory_space<vmem>>, vector<2x1x16x32xf32>,
    %c7_i32 = arith.constant 7 : i32
    %c0_163 = arith.constant 0 : index
    %c7_164 = arith.constant 7 : index
    %c0_165 = arith.constant 0 : index
    %268 = vector.load %arg6[%c0_163, %c7_164, %c0_165] : memref<2x25x32xf32, #tpu.memory_space<vmem>>, vector<2x16x32xf32>
    %c0_166 = arith.constant 0 : index
    %c8_167 = arith.constant 8 : index
    %c0_168 = arith.constant 0 : index
    %269 = vector.load %arg6[%c0_166, %c8_167, %c0_168] : memref<2x25x32xf32, #tpu.memory_space<vmem>>, vector<2x16x32xf32>
    %c0_169 = arith.constant 0 : index
    %c9_170 = arith.constant 9 : index
    %c0_171 = arith.constant 0 : index
    %270 = vector.load %arg6[%c0_169, %c9_170, %c0_171] : memref<2x25x32xf32, #tpu.memory_space<vmem>>, vector<2x16x32xf32>
    %271 = tpu.concatenate %268, %269, %270 in 2 : vector<2x16x32xf32>, vector<2x16x32xf32>, vector<2x16x32xf32> -> vector<2x16x96xf32>
    %272 = vector.shape_cast %271 : vector<2x16x96xf32> to vector<32x96xf32>
    %273 = arith.truncf %272 : vector<32x96xf32> to vector<32x96xbf16>
    %274 = arith.index_cast %c7_i32 : i32 to index
    %c0_172 = arith.constant 0 : index
    %c0_173 = arith.constant 0 : index
    %c0_174 = arith.constant 0 : index
    %275 = vector.load %arg1[%274, %c0_172, %c0_173, %c0_174] : memref<8x2x16x128xf32, #tpu.memory_space<vmem>>, vector<1x2x16x128xf32>
    %276 = vector.shape_cast %275 : vector<1x2x16x128xf32> to vector<2x16x128xf32>
    %277 = vector.shape_cast %276 : vector<2x16x128xf32> to vector<32x128xf32>
    %c0_175 = arith.constant 0 : index
    %c0_176 = arith.constant 0 : index
    %278 = vector.load %arg2[%c0_175, %c0_176] : memref<96x128xbf16, #tpu.memory_space<vmem>>, vector<96x128xbf16>
    %cst_177 = arith.constant dense<0.000000e+00> : vector<32x128xf32>
    %279 = tpu.matmul %273, %278, %cst_177 {dimension_numbers = #tpu.dot_dimension_numbers<[1], [0], [0], [1], [0, 0, 1, 1], [], []>} : vector<32x96xbf16>, vector<96x128xbf16>, vector<32x128xf32> -> vector<32x128xf32>
    %280 = arith.addf %277, %279 : vector<32x128xf32>
    %281 = arith.mulf %280, %7 : vector<32x128xf32>
    %282 = arith.negf %281 : vector<32x128xf32>
    %283 = math.exp %282 : vector<32x128xf32>
    %cst_178 = arith.constant 1.000000e+00 : f32
    %284 = vector.broadcast %cst_178 : f32 to vector<32x128xf32>
    %285 = arith.addf %284, %283 : vector<32x128xf32>
    %286 = arith.divf %284, %285 : vector<32x128xf32>
    %287 = arith.addf %286, %286 : vector<32x128xf32>
    %cst_179 = arith.constant 1.000000e+00 : f32
    %288 = vector.broadcast %cst_179 : f32 to vector<32x128xf32>
    %289 = arith.subf %287, %288 : vector<32x128xf32>
    %290 = arith.select %4, %289, %286 : vector<32x128xi1>, vector<32x128xf32>
    %291 = vector.extract_strided_slice %290 {offsets = [0, 0], sizes = [32, 32], strides = [1, 1]} : vector<32x128xf32> to vector<32x32xf32>
    %292 = vector.extract_strided_slice %290 {offsets = [0, 32], sizes = [32, 32], strides = [1, 1]} : vector<32x128xf32> to vector<32x32xf32>
    %293 = vector.extract_strided_slice %290 {offsets = [0, 64], sizes = [32, 32], strides = [1, 1]} : vector<32x128xf32> to vector<32x32xf32>
    %294 = vector.extract_strided_slice %290 {offsets = [0, 96], sizes = [32, 32], strides = [1, 1]} : vector<32x128xf32> to vector<32x32xf32>
    %295 = arith.mulf %292, %260 : vector<32x32xf32>
    %296 = arith.mulf %291, %294 : vector<32x32xf32>
    %297 = arith.addf %295, %296 : vector<32x32xf32>
    %298 = math.tanh %297 : vector<32x32xf32>
    %299 = arith.mulf %293, %298 : vector<32x32xf32>
    %300 = vector.shape_cast %299 : vector<32x32xf32> to vector<2x16x32xf32>
    %c0_180 = arith.constant 0 : index
    %c8_181 = arith.constant 8 : index
    %c0_182 = arith.constant 0 : index
    %301 = vector.load %arg6[%c0_180, %c8_181, %c0_182] : memref<2x25x32xf32, #tpu.memory_space<vmem>>, vector<2x16x32xf32>
    tpu.vector_store %arg6[%c0_180, %c8_181, %c0_182], %300 {strides = array<i32>} : memref<2x25x32xf32, #tpu.memory_space<vmem>>, vector<2x16x32xf32>,
    %302 = vector.shape_cast %299 : vector<32x32xf32> to vector<2x1x16x32xf32>
    %c0_183 = arith.constant 0 : index
    %303 = arith.index_cast %c7_i32 : i32 to index
    %c0_184 = arith.constant 0 : index
    %c0_185 = arith.constant 0 : index
    %304 = vector.load %arg3[%c0_183, %303, %c0_184, %c0_185] : memref<2x8x16x32xf32, #tpu.memory_space<vmem>>, vector<2x1x16x32xf32>
    tpu.vector_store %arg3[%c0_183, %303, %c0_184, %c0_185], %302 {strides = array<i32>} : memref<2x8x16x32xf32, #tpu.memory_space<vmem>>, vector<2x1x16x32xf32>,
    %c8_i32 = arith.constant 8 : i32
    %c0_186 = arith.constant 0 : index
    %c8_187 = arith.constant 8 : index
    %c0_188 = arith.constant 0 : index
    %305 = vector.load %arg6[%c0_186, %c8_187, %c0_188] : memref<2x25x32xf32, #tpu.memory_space<vmem>>, vector<2x16x32xf32>
    %c0_189 = arith.constant 0 : index
    %c0_190 = arith.constant 0 : index
    %c0_191 = arith.constant 0 : index
    %306 = vector.load %arg4[%c0_189, %c0_190, %c0_191] : memref<2x16x32xf32, #tpu.memory_space<vmem>>, vector<2x16x32xf32>
    tpu.vector_store %arg4[%c0_189, %c0_190, %c0_191], %305 {strides = array<i32>} : memref<2x16x32xf32, #tpu.memory_space<vmem>>, vector<2x16x32xf32>,
    %307 = vector.shape_cast %297 : vector<32x32xf32> to vector<2x16x32xf32>
    %c0_192 = arith.constant 0 : index
    %c0_193 = arith.constant 0 : index
    %c0_194 = arith.constant 0 : index
    %308 = vector.load %arg5[%c0_192, %c0_193, %c0_194] : memref<2x16x32xf32, #tpu.memory_space<vmem>>, vector<2x16x32xf32>
    tpu.vector_store %arg5[%c0_192, %c0_193, %c0_194], %307 {strides = array<i32>} : memref<2x16x32xf32, #tpu.memory_space<vmem>>, vector<2x16x32xf32>,
    return
  }
  func.func @transform_0(%arg0: i32) -> (i32, i32, i32, i32) {
    %c0_i32 = arith.constant 0 : i32
    %c0_i32_0 = arith.constant 0 : i32
    %c0_i32_1 = arith.constant 0 : i32
    %c0_i32_2 = arith.constant 0 : i32
    return %c0_i32, %arg0, %c0_i32_0, %c0_i32_1 : i32, i32, i32, i32
  }
  func.func @transform_1(%arg0: i32) -> (i32, i32) {
    %c0_i32 = arith.constant 0 : i32
    %c0_i32_0 = arith.constant 0 : i32
    %c0_i32_1 = arith.constant 0 : i32
    return %c0_i32, %c0_i32_0 : i32, i32
  }
  func.func @transform_2(%arg0: i32) -> (i32, i32, i32, i32) {
    %c0_i32 = arith.constant 0 : i32
    %c0_i32_0 = arith.constant 0 : i32
    %c0_i32_1 = arith.constant 0 : i32
    %c0_i32_2 = arith.constant 0 : i32
    return %arg0, %c0_i32, %c0_i32_0, %c0_i32_1 : i32, i32, i32, i32
  }
  func.func @transform_3(%arg0: i32) -> (i32, i32, i32) {
    %c0_i32 = arith.constant 0 : i32
    %c0_i32_0 = arith.constant 0 : i32
    %c0_i32_1 = arith.constant 0 : i32
    return %arg0, %c0_i32, %c0_i32_0 : i32, i32, i32
  }
  func.func @transform_4(%arg0: i32) -> (i32, i32, i32) {
    %c0_i32 = arith.constant 0 : i32
    %c0_i32_0 = arith.constant 0 : i32
    %c0_i32_1 = arith.constant 0 : i32
    return %arg0, %c0_i32, %c0_i32_0 : i32, i32, i32
  }
}

</mosaic_0001>

<llo_original>
// kernel: conv_lstm_pallas.1
$region0: #{conv_lstm_pallas.1}
  #allocation0 [shape = 'u32[]', space=smem, size = 0x4, offset = 0x4, fixed_abs, tag = 'smem constant byte address 0x4 - core index']
  #allocation1 [shape = 'u32[144,128]{1,0:T(1,128)}', space=vmem, size = 0x12000, scoped, tag = 'internal scratch']
  #allocation2 [shape = 'f32[2,25,32]{2,1,0:T(8,128)}', space=vmem, size = 0x8000, scoped, tag = 'scratch operand']
  %s0 = inlined_call_operand.vmem [shape: f32[8,2,16,128], index: 0, kind: input, shape index: {}]
  %s1 = inlined_call_operand.vmem [shape: bf16[96,128], index: 1, kind: input, shape index: {}]
  %s2 = inlined_call_operand.hbm [shape: f32[2,8,16,32], index: 2, kind: output, shape index: {0}]
  %s3 = inlined_call_operand.hbm [shape: f32[2,16,32], index: 3, kind: output, shape index: {1}]
  %s4 = inlined_call_operand.hbm [shape: f32[2,16,32], index: 4, kind: output, shape index: {2}]
  %5 = xla_tuple %s2, %s3, %s4
  %s6 = sld [smem:[#allocation0]]
  $region34: #{conv_lstm_pallas.1} parent=0
    _
  %s8 = ssub.s32 1, %s6
  %s9 = scalar_select 0, %s8, %s6
  $region1: #{conv_lstm_pallas.1} parent=0
    #allocation3 [shape = 'u8[131072]{0}', space=vmem, size = 0x20000, scoped, tag = 'output window, operand 0, single buffered']
    #allocation4 [shape = 's32[1]{0}', space=sflag, size = 0x4, scoped, tag = 'scoped memory for conv_lstm_pallas.1']
    #allocation5 [shape = 'u8[16384]{0}', space=vmem, size = 0x4000, scoped, tag = 'output window, operand 1, single buffered']
    #allocation6 [shape = 's32[1]{0}', space=sflag, size = 0x4, scoped, tag = 'scoped memory for conv_lstm_pallas.1']
    #allocation7 [shape = 'u8[16384]{0}', space=vmem, size = 0x4000, scoped, tag = 'output window, operand 2, single buffered']
    %10 = vsyncpa [#allocation4], 0
    %11 = vsyncpa [#allocation6], 0
    // Predicated region
    $region2: #{conv_lstm_pallas.1} parent=1 // pred_check
      _
    $region3: #{conv_lstm_pallas.1} parent=1 // pred_check_branch
      %13 = sbr.rel (0) target = $region5
    $region4: #{conv_lstm_pallas.1} parent=1 // pred_region
      _
    $region5: #{conv_lstm_pallas.1} parent=1 // pred_fallthru
      _
    // Predicated region
    $region6: #{conv_lstm_pallas.1} parent=1 // pred_check
      _
    $region7: #{conv_lstm_pallas.1} parent=1 // pred_check_branch
      %15 = sbr.rel (0) target = $region9
    $region8: #{conv_lstm_pallas.1} parent=1 // pred_region
      _
    $region9: #{conv_lstm_pallas.1} parent=1 // pred_fallthru
      _
    %vm17 = vcmask 261120
    %18 = vst.msk [vmem:[#allocation2] sm:$0xff] %vm17, 0.0
    %19 = vst.msk [vmem:[#allocation2 + $0x8] sm:$0xff] %vm17, 0.0
    %20 = vst.msk [vmem:[#allocation2 + $0x10] sm:$0xff] %vm17, 0.0
    %vm21 = vcmask 253952
    %22 = vst.msk [vmem:[#allocation2 + $0x18] sm:$0x1] %vm21, 0.0
    %23 = vst.msk [vmem:[#allocation2 + $0x20] sm:$0xff] %vm17, 0.0
    %24 = vst.msk [vmem:[#allocation2 + $0x28] sm:$0xff] %vm17, 0.0
    %25 = vst.msk [vmem:[#allocation2 + $0x30] sm:$0xff] %vm17, 0.0
    %26 = vst.msk [vmem:[#allocation2 + $0x38] sm:$0x1] %vm21, 0.0
    %v27 = vlaneseq
    %v28 = vand.u32 %v27, 127
    %vm29 = vcmp.ge.s32.totalorder %v28, 96
    %v30 = vsel %vm29, 2.0, 1.0
    %v31 = vld [vmem:[#allocation2 + $0x7] sm:$0xff]
    %v32 = vld [vmem:[#allocation2 + $0xf] sm:$0xff]
    %v33 = vld [vmem:[#allocation2 + $0x27] sm:$0xff]
    %v34 = vld [vmem:[#allocation2 + $0x2f] sm:$0xff]
    %v35 = vld [vmem:[#allocation2 + $0x8] sm:$0xff]
    %v36 = vld [vmem:[#allocation2 + $0x10] sm:$0xff]
    %v37 = vld [vmem:[#allocation2 + $0x28] sm:$0xff]
    %v38 = vld [vmem:[#allocation2 + $0x30] sm:$0xff]
    %v39 = vld [vmem:[#allocation2 + $0x9] sm:$0xff]
    %v40 = vld [vmem:[#allocation2 + $0x11] sm:$0xff]
    %v41 = vld [vmem:[#allocation2 + $0x29] sm:$0xff]
    %v42 = vld [vmem:[#allocation2 + $0x31] sm:$0xff]
    %47 = vrot.lane.b32.xlu0 %v35, 32
    %v48 = vpop.permute.xlu0 %47
    %49 = vrot.lane.b32.xlu0 %v36, 32
    %v50 = vpop.permute.xlu0 %49
    %51 = vrot.lane.b32.xlu0 %v37, 32
    %v52 = vpop.permute.xlu0 %51
    %53 = vrot.lane.b32.xlu0 %v38, 32
    %v54 = vpop.permute.xlu0 %53
    %63 = vrot.lane.b32.xlu0 %v39, 64
    %v64 = vpop.permute.xlu0 %63
    %65 = vrot.lane.b32.xlu0 %v40, 64
    %v66 = vpop.permute.xlu0 %65
    %67 = vrot.lane.b32.xlu0 %v41, 64
    %v68 = vpop.permute.xlu0 %67
    %69 = vrot.lane.b32.xlu0 %v42, 64
    %v70 = vpop.permute.xlu0 %69
    %v75 = vsel %vm17, %v31, %v48
    %v76 = vsel %vm17, %v32, %v50
    %v77 = vsel %vm17, %v33, %v52
    %v78 = vsel %vm17, %v34, %v54
    %vm79 = vcmask 523264
    %v80 = vsel %vm79, %v75, %v64
    %v81 = vsel %vm79, %v76, %v66
    %v82 = vsel %vm79, %v77, %v68
    %v83 = vsel %vm79, %v78, %v70
    %v84 = vpack.c.bf16 %v81, %v80
    %v85 = vpack.c.bf16 %v83, %v82
    %v86 = vld [vmem:[%s0] sm:$0xff]
    %v87 = vld [vmem:[%s0 + $0x8] sm:$0xff]
    %v88 = vld [vmem:[%s0 + $0x10] sm:$0xff]
    %v89 = vld [vmem:[%s0 + $0x18] sm:$0xff]
    %v90 = vld [vmem:[%s1] sm:$0xf]
    %v91 = vld [vmem:[%s1 + $0x4] sm:$0xf]
    %v92 = vld [vmem:[%s1 + $0x8] sm:$0xf]
    %v93 = vld [vmem:[%s1 + $0xc] sm:$0xf]
    %v94 = vld [vmem:[%s1 + $0x10] sm:$0xf]
    %v95 = vld [vmem:[%s1 + $0x14] sm:$0xf]
    %v96 = vld [vmem:[%s1 + $0x18] sm:$0xf]
    %v97 = vld [vmem:[%s1 + $0x1c] sm:$0xf]
    %v98 = vld [vmem:[%s1 + $0x20] sm:$0xf]
    %v99 = vld [vmem:[%s1 + $0x24] sm:$0xf]
    %v100 = vld [vmem:[%s1 + $0x28] sm:$0xf]
    %v101 = vld [vmem:[%s1 + $0x2c] sm:$0xf]
    %v114 = vunpack.c.l.b16 %v90
    %v115 = vunpack.c.l.b16 %v91
    %v116 = vunpack.c.l.b16 %v92
    %v117 = vunpack.c.l.b16 %v93
    %v118 = vunpack.c.l.b16 %v94
    %v119 = vunpack.c.l.b16 %v95
    %v120 = vunpack.c.l.b16 %v96
    %v121 = vunpack.c.l.b16 %v97
    %v122 = vunpack.c.l.b16 %v98
    %v123 = vunpack.c.l.b16 %v99
    %v124 = vunpack.c.l.b16 %v100
    %v125 = vunpack.c.l.b16 %v101
    %v126 = vpack.c.b16 %v115, %v114
    %v127 = vpack.c.b16 %v117, %v116
    %v128 = vpack.c.b16 %v119, %v118
    %v129 = vpack.c.b16 %v121, %v120
    %v130 = vpack.c.b16 %v123, %v122
    %v131 = vpack.c.b16 %v125, %v124
    %vm138 = vcmask 785408
    %v140 = vsel %vm138, %v84, 0
    %v143 = vsel %vm138, %v85, 0
    %145 = vmatprep.subr.bf16.mxu0 0
    %146 = vmatpush1.bf16.msra.mxu0 0
    %147 = vmatprep.subr.bf16.mxu0 0
    %148 = vmatpush1.bf16.msra.mxu0 0
    %149 = vmatprep.subr.bf16.mxu0 0
    %150 = vmatpush1.bf16.msra.mxu0 %v131
    %151 = vmatprep.subr.bf16.mxu0 0
    %152 = vmatpush1.bf16.msra.mxu0 %v130
    %153 = vmatprep.subr.bf16.mxu0 0
    %154 = vmatpush1.bf16.msra.mxu0 %v129
    %155 = vmatprep.subr.bf16.mxu0 0
    %156 = vmatpush1.bf16.msra.mxu0 %v128
    %157 = vmatprep.subr.bf16.mxu0 0
    %158 = vmatpush1.bf16.msra.mxu0 %v127
    %159 = vmatprep.subr.bf16.mxu0 0
    %160 = vmatpush1.bf16.msra.mxu0 %v126
    %161 = vmatprep.subr.bf16.mxu0 0
    %162 = vmatpush2.bf16.msra.mxu0 0
    %163 = vmatprep.subr.bf16.mxu0 0
    %164 = vmatpush2.bf16.msra.mxu0 0
    %165 = vmatprep.subr.bf16.mxu0 0
    %166 = vmatpush2.bf16.msra.mxu0 0
    %167 = vmatprep.subr.bf16.mxu0 0
    %168 = vmatpush2.bf16.msra.mxu0 0
    %169 = vmatprep.subr.bf16.mxu0 0
    %170 = vmatpush2.bf16.msra.mxu0 0
    %171 = vmatprep.subr.bf16.mxu0 0
    %172 = vmatpush2.bf16.msra.mxu0 0
    %173 = vmatprep.subr.bf16.mxu0 0
    %174 = vmatpush2.bf16.msra.mxu0 0
    %175 = vmatprep.subr.bf16.mxu0 0
    %176 = vmatpush2.bf16.msra.mxu0 0
    %177 = vmatprep.mubr.bf16.mxu0 0
    %178 = vmatmul.mubr.bf16.gmra.mxu0 %v140
    %v179 = vpop.f32.mrf.mxu0
    %v180 = vadd.f32 0.0, %v179
    %v181 = vpop.f32.mrf.mxu0
    %v182 = vpop.f32.mrf.mxu0
    %v183 = vadd.f32 0.0, %v182
    %v184 = vpop.f32.mrf.mxu0
    %185 = vmatprep.mubr.bf16.mxu0 0
    %186 = vmatmul.mubr.bf16.gmra.mxu0 %v143
    %v187 = vpop.f32.mrf.mxu0
    %v188 = vadd.f32 0.0, %v187
    %v189 = vpop.f32.mrf.mxu0
    %v190 = vpop.f32.mrf.mxu0
    %v191 = vadd.f32 0.0, %v190
    %v192 = vpop.f32.mrf.mxu0
    %193 = vdwg.mxu0
    %v194 = vadd.f32 %v86, %v180
    %v195 = vadd.f32 %v87, %v183
    %v196 = vadd.f32 %v88, %v188
    %v197 = vadd.f32 %v89, %v191
    %v198 = vmul.f32 %v194, %v30
    %v199 = vmul.f32 %v195, %v30
    %v200 = vmul.f32 %v196, %v30
    %v201 = vmul.f32 %v197, %v30
    %v202 = vxor.u32 %v198, 2147483648
    %v203 = vxor.u32 %v199, 2147483648
    %v204 = vxor.u32 %v200, 2147483648
    %v205 = vxor.u32 %v201, 2147483648
    %v206 = vmul.f32 %v202, 1.442695
    %v207 = vpow.pop %v206
    %v208 = vmul.f32 %v203, 1.442695
    %v209 = vpow.pop %v208
    %v210 = vmul.f32 %v204, 1.442695
    %v211 = vpow.pop %v210
    %v212 = vmul.f32 %v205, 1.442695
    %v213 = vpow.pop %v212
    %v214 = vadd.f32 %v207, 1.0
    %v215 = vadd.f32 %v209, 1.0
    %v216 = vadd.f32 %v211, 1.0
    %v217 = vadd.f32 %v213, 1.0
    %v218 = vrcp.pop %v214
    %v219 = vmul.f32 1.0, %v218
    %v220 = vrcp.pop %v215
    %v221 = vmul.f32 1.0, %v220
    %v222 = vrcp.pop %v216
    %v223 = vmul.f32 1.0, %v222
    %v224 = vrcp.pop %v217
    %v225 = vmul.f32 1.0, %v224
    %v226 = vadd.f32 %v219, %v219
    %v227 = vadd.f32 %v221, %v221
    %v228 = vadd.f32 %v223, %v223
    %v229 = vadd.f32 %v225, %v225
    %v230 = vsub.f32 %v226, 1.0
    %v231 = vsub.f32 %v227, 1.0
    %v232 = vsub.f32 %v228, 1.0
    %v233 = vsub.f32 %v229, 1.0
    %v234 = vsel %vm29, %v230, %v219
    %v235 = vsel %vm29, %v231, %v221
    %v236 = vsel %vm29, %v232, %v223
    %v237 = vsel %vm29, %v233, %v225
    %v238 = vmul.f32 %v234, 0.0
    %v239 = vmul.f32 %v235, 0.0
    %v240 = vmul.f32 %v236, 0.0
    %v241 = vmul.f32 %v237, 0.0
    %246 = vrot.lane.b32.xlu0 %v234, 32
    %v247 = vpop.permute.xlu0 %246
    %248 = vrot.lane.b32.xlu0 %v235, 32
    %v249 = vpop.permute.xlu0 %248
    %250 = vrot.lane.b32.xlu0 %v236, 32
    %v251 = vpop.permute.xlu0 %250
    %252 = vrot.lane.b32.xlu0 %v237, 32
    %v253 = vpop.permute.xlu0 %252
    %v258 = vmul.f32 %v234, %v247
    %v259 = vmul.f32 %v235, %v249
    %v260 = vmul.f32 %v236, %v251
    %v261 = vmul.f32 %v237, %v253
    %266 = vrot.lane.b32.xlu0 %v258, 32
    %v267 = vpop.permute.xlu0 %266
    %268 = vrot.lane.b32.xlu0 %v259, 32
    %v269 = vpop.permute.xlu0 %268
    %270 = vrot.lane.b32.xlu0 %v260, 32
    %v271 = vpop.permute.xlu0 %270
    %272 = vrot.lane.b32.xlu0 %v261, 32
    %v273 = vpop.permute.xlu0 %272
    %v278 = vadd.f32 %v238, %v267
    %v279 = vadd.f32 %v239, %v269
    %v280 = vadd.f32 %v240, %v271
    %v281 = vadd.f32 %v241, %v273
    %v282 = vtanh.pop %v278
    %v283 = vtanh.pop %v279
    %v284 = vtanh.pop %v280
    %v285 = vtanh.pop %v281
    %290 = vrot.lane.b32.xlu0 %v282, 32
    %v291 = vpop.permute.xlu0 %290
    %292 = vrot.lane.b32.xlu0 %v283, 32
    %v293 = vpop.permute.xlu0 %292
    %294 = vrot.lane.b32.xlu0 %v284, 32
    %v295 = vpop.permute.xlu0 %294
    %296 = vrot.lane.b32.xlu0 %v285, 32
    %v297 = vpop.permute.xlu0 %296
    %v302 = vmul.f32 %v234, %v291
    %v303 = vmul.f32 %v235, %v293
    %v304 = vmul.f32 %v236, %v295
    %v305 = vmul.f32 %v237, %v297
    %310 = vrot.lane.b32.xlu0 %v302, 64
    %v311 = vpop.permute.xlu0 %310
    %312 = vrot.lane.b32.xlu0 %v303, 64
    %v313 = vpop.permute.xlu0 %312
    %314 = vrot.lane.b32.xlu0 %v304, 64
    %v315 = vpop.permute.xlu0 %314
    %316 = vrot.lane.b32.xlu0 %v305, 64
    %v317 = vpop.permute.xlu0 %316
    %322 = vst.msk [vmem:[#allocation2 + $0x8] sm:$0xff] %vm17, %v311
    %323 = vst.msk [vmem:[#allocation2 + $0x10] sm:$0xff] %vm17, %v313
    %324 = vst.msk [vmem:[#allocation2 + $0x28] sm:$0xff] %vm17, %v315
    %325 = vst.msk [vmem:[#allocation2 + $0x30] sm:$0xff] %vm17, %v317
    %326 = vst.msk [vmem:[#allocation3] sm:$0xff] %vm17, %v311
    %327 = vst.msk [vmem:[#allocation3 + $0x8] sm:$0xff] %vm17, %v313
    %328 = vst.msk [vmem:[#allocation3 + $0x80] sm:$0xff] %vm17, %v315
    %329 = vst.msk [vmem:[#allocation3 + $0x88] sm:$0xff] %vm17, %v317
    %v330 = vld [vmem:[#allocation2 + $0x7] sm:$0xff]
    %v331 = vld [vmem:[#allocation2 + $0xf] sm:$0xff]
    %v332 = vld [vmem:[#allocation2 + $0x27] sm:$0xff]
    %v333 = vld [vmem:[#allocation2 + $0x2f] sm:$0xff]
    %v334 = vld [vmem:[#allocation2 + $0x8] sm:$0xff]
    %v335 = vld [vmem:[#allocation2 + $0x10] sm:$0xff]
    %v336 = vld [vmem:[#allocation2 + $0x28] sm:$0xff]
    %v337 = vld [vmem:[#allocation2 + $0x30] sm:$0xff]
    %v338 = vld [vmem:[#allocation2 + $0x9] sm:$0xff]
    %v339 = vld [vmem:[#allocation2 + $0x11] sm:$0xff]
    %v340 = vld [vmem:[#allocation2 + $0x29] sm:$0xff]
    %v341 = vld [vmem:[#allocation2 + $0x31] sm:$0xff]
    %346 = vrot.lane.b32.xlu0 %v334, 32
    %v347 = vpop.permute.xlu0 %346
    %348 = vrot.lane.b32.xlu0 %v335, 32
    %v349 = vpop.permute.xlu0 %348
    %350 = vrot.lane.b32.xlu0 %v336, 32
    %v351 = vpop.permute.xlu0 %350
    %352 = vrot.lane.b32.xlu0 %v337, 32
    %v353 = vpop.permute.xlu0 %352
    %362 = vrot.lane.b32.xlu0 %v338, 64
    %v363 = vpop.permute.xlu0 %362
    %364 = vrot.lane.b32.xlu0 %v339, 64
    %v365 = vpop.permute.xlu0 %364
    %366 = vrot.lane.b32.xlu0 %v340, 64
    %v367 = vpop.permute.xlu0 %366
    %368 = vrot.lane.b32.xlu0 %v341, 64
    %v369 = vpop.permute.xlu0 %368
    %v374 = vsel %vm17, %v330, %v347
    %v375 = vsel %vm17, %v331, %v349
    %v376 = vsel %vm17, %v332, %v351
    %v377 = vsel %vm17, %v333, %v353
    %v378 = vsel %vm79, %v374, %v363
    %v379 = vsel %vm79, %v375, %v365
    %v380 = vsel %vm79, %v376, %v367
    %v381 = vsel %vm79, %v377, %v369
    %v382 = vpack.c.bf16 %v379, %v378
    %v383 = vpack.c.bf16 %v381, %v380
    %s384 = scalar_lea.vmem %s0, 32
    %v385 = vld [vmem:[%s384] sm:$0xff]
    %v386 = vld [vmem:[%s384 + $0x8] sm:$0xff]
    %v387 = vld [vmem:[%s384 + $0x10] sm:$0xff]
    %v388 = vld [vmem:[%s384 + $0x18] sm:$0xff]
    %v389 = vld [vmem:[%s1] sm:$0xf]
    %v390 = vld [vmem:[%s1 + $0x4] sm:$0xf]
    %v391 = vld [vmem:[%s1 + $0x8] sm:$0xf]
    %v392 = vld [vmem:[%s1 + $0xc] sm:$0xf]
    %v393 = vld [vmem:[%s1 + $0x10] sm:$0xf]
    %v394 = vld [vmem:[%s1 + $0x14] sm:$0xf]
    %v395 = vld [vmem:[%s1 + $0x18] sm:$0xf]
    %v396 = vld [vmem:[%s1 + $0x1c] sm:$0xf]
    %v397 = vld [vmem:[%s1 + $0x20] sm:$0xf]
    %v398 = vld [vmem:[%s1 + $0x24] sm:$0xf]
    %v399 = vld [vmem:[%s1 + $0x28] sm:$0xf]
    %v400 = vld [vmem:[%s1 + $0x2c] sm:$0xf]
    %v413 = vunpack.c.l.b16 %v389
    %v414 = vunpack.c.l.b16 %v390
    %v415 = vunpack.c.l.b16 %v391
    %v416 = vunpack.c.l.b16 %v392
    %v417 = vunpack.c.l.b16 %v393
    %v418 = vunpack.c.l.b16 %v394
    %v419 = vunpack.c.l.b16 %v395
    %v420 = vunpack.c.l.b16 %v396
    %v421 = vunpack.c.l.b16 %v397
    %v422 = vunpack.c.l.b16 %v398
    %v423 = vunpack.c.l.b16 %v399
    %v424 = vunpack.c.l.b16 %v400
    %v425 = vpack.c.b16 %v414, %v413
    %v426 = vpack.c.b16 %v416, %v415
    %v427 = vpack.c.b16 %v418, %v417
    %v428 = vpack.c.b16 %v420, %v419
    %v429 = vpack.c.b16 %v422, %v421
    %v430 = vpack.c.b16 %v424, %v423
    %v438 = vsel %vm138, %v382, 0
    %v441 = vsel %vm138, %v383, 0
    %443 = vmatprep.subr.bf16.mxu0 0
    %444 = vmatpush1.bf16.msra.mxu0 0
    %445 = vmatprep.subr.bf16.mxu0 0
    %446 = vmatpush1.bf16.msra.mxu0 0
    %447 = vmatprep.subr.bf16.mxu0 0
    %448 = vmatpush1.bf16.msra.mxu0 %v430
    %449 = vmatprep.subr.bf16.mxu0 0
    %450 = vmatpush1.bf16.msra.mxu0 %v429
    %451 = vmatprep.subr.bf16.mxu0 0
    %452 = vmatpush1.bf16.msra.mxu0 %v428
    %453 = vmatprep.subr.bf16.mxu0 0
    %454 = vmatpush1.bf16.msra.mxu0 %v427
    %455 = vmatprep.subr.bf16.mxu0 0
    %456 = vmatpush1.bf16.msra.mxu0 %v426
    %457 = vmatprep.subr.bf16.mxu0 0
    %458 = vmatpush1.bf16.msra.mxu0 %v425
    %459 = vmatprep.subr.bf16.mxu0 0
    %460 = vmatpush2.bf16.msra.mxu0 0
    %461 = vmatprep.subr.bf16.mxu0 0
    %462 = vmatpush2.bf16.msra.mxu0 0
    %463 = vmatprep.subr.bf16.mxu0 0
    %464 = vmatpush2.bf16.msra.mxu0 0
    %465 = vmatprep.subr.bf16.mxu0 0
    %466 = vmatpush2.bf16.msra.mxu0 0
    %467 = vmatprep.subr.bf16.mxu0 0
    %468 = vmatpush2.bf16.msra.mxu0 0
    %469 = vmatprep.subr.bf16.mxu0 0
    %470 = vmatpush2.bf16.msra.mxu0 0
    %471 = vmatprep.subr.bf16.mxu0 0
    %472 = vmatpush2.bf16.msra.mxu0 0
    %473 = vmatprep.subr.bf16.mxu0 0
    %474 = vmatpush2.bf16.msra.mxu0 0
    %475 = vmatprep.mubr.bf16.mxu0 0
    %476 = vmatmul.mubr.bf16.gmra.mxu0 %v438
    %v477 = vpop.f32.mrf.mxu0
    %v478 = vadd.f32 0.0, %v477
    %v479 = vpop.f32.mrf.mxu0
    %v480 = vpop.f32.mrf.mxu0
    %v481 = vadd.f32 0.0, %v480
    %v482 = vpop.f32.mrf.mxu0
    %483 = vmatprep.mubr.bf16.mxu0 0
    %484 = vmatmul.mubr.bf16.gmra.mxu0 %v441
    %v485 = vpop.f32.mrf.mxu0
    %v486 = vadd.f32 0.0, %v485
    %v487 = vpop.f32.mrf.mxu0
    %v488 = vpop.f32.mrf.mxu0
    %v489 = vadd.f32 0.0, %v488
    %v490 = vpop.f32.mrf.mxu0
    %491 = vdwg.mxu0
    %v492 = vadd.f32 %v385, %v478
    %v493 = vadd.f32 %v386, %v481
    %v494 = vadd.f32 %v387, %v486
    %v495 = vadd.f32 %v388, %v489
    %v496 = vmul.f32 %v492, %v30
    %v497 = vmul.f32 %v493, %v30
    %v498 = vmul.f32 %v494, %v30
    %v499 = vmul.f32 %v495, %v30
    %v500 = vxor.u32 %v496, 2147483648
    %v501 = vxor.u32 %v497, 2147483648
    %v502 = vxor.u32 %v498, 2147483648
    %v503 = vxor.u32 %v499, 2147483648
    %v504 = vmul.f32 %v500, 1.442695
    %v505 = vpow.pop %v504
    %v506 = vmul.f32 %v501, 1.442695
    %v507 = vpow.pop %v506
    %v508 = vmul.f32 %v502, 1.442695
    %v509 = vpow.pop %v508
    %v510 = vmul.f32 %v503, 1.442695
    %v511 = vpow.pop %v510
    %v512 = vadd.f32 %v505, 1.0
    %v513 = vadd.f32 %v507, 1.0
    %v514 = vadd.f32 %v509, 1.0
    %v515 = vadd.f32 %v511, 1.0
    %v516 = vrcp.pop %v512
    %v517 = vmul.f32 1.0, %v516
    %v518 = vrcp.pop %v513
    %v519 = vmul.f32 1.0, %v518
    %v520 = vrcp.pop %v514
    %v521 = vmul.f32 1.0, %v520
    %v522 = vrcp.pop %v515
    %v523 = vmul.f32 1.0, %v522
    %v524 = vadd.f32 %v517, %v517
    %v525 = vadd.f32 %v519, %v519
    %v526 = vadd.f32 %v521, %v521
    %v527 = vadd.f32 %v523, %v523
    %v528 = vsub.f32 %v524, 1.0
    %v529 = vsub.f32 %v525, 1.0
    %v530 = vsub.f32 %v526, 1.0
    %v531 = vsub.f32 %v527, 1.0
    %v532 = vsel %vm29, %v528, %v517
    %v533 = vsel %vm29, %v529, %v519
    %v534 = vsel %vm29, %v530, %v521
    %v535 = vsel %vm29, %v531, %v523
    %v536 = vmul.f32 %v532, %v278
    %v537 = vmul.f32 %v533, %v279
    %v538 = vmul.f32 %v534, %v280
    %v539 = vmul.f32 %v535, %v281
    %544 = vrot.lane.b32.xlu0 %v532, 32
    %v545 = vpop.permute.xlu0 %544
    %546 = vrot.lane.b32.xlu0 %v533, 32
    %v547 = vpop.permute.xlu0 %546
    %548 = vrot.lane.b32.xlu0 %v534, 32
    %v549 = vpop.permute.xlu0 %548
    %550 = vrot.lane.b32.xlu0 %v535, 32
    %v551 = vpop.permute.xlu0 %550
    %v556 = vmul.f32 %v532, %v545
    %v557 = vmul.f32 %v533, %v547
    %v558 = vmul.f32 %v534, %v549
    %v559 = vmul.f32 %v535, %v551
    %564 = vrot.lane.b32.xlu0 %v556, 32
    %v565 = vpop.permute.xlu0 %564
    %566 = vrot.lane.b32.xlu0 %v557, 32
    %v567 = vpop.permute.xlu0 %566
    %568 = vrot.lane.b32.xlu0 %v558, 32
    %v569 = vpop.permute.xlu0 %568
    %570 = vrot.lane.b32.xlu0 %v559, 32
    %v571 = vpop.permute.xlu0 %570
    %v576 = vadd.f32 %v536, %v565
    %v577 = vadd.f32 %v537, %v567
    %v578 = vadd.f32 %v538, %v569
    %v579 = vadd.f32 %v539, %v571
    %v580 = vtanh.pop %v576
    %v581 = vtanh.pop %v577
    %v582 = vtanh.pop %v578
    %v583 = vtanh.pop %v579
    %588 = vrot.lane.b32.xlu0 %v580, 32
    %v589 = vpop.permute.xlu0 %588
    %590 = vrot.lane.b32.xlu0 %v581, 32
    %v591 = vpop.permute.xlu0 %590
    %592 = vrot.lane.b32.xlu0 %v582, 32
    %v593 = vpop.permute.xlu0 %592
    %594 = vrot.lane.b32.xlu0 %v583, 32
    %v595 = vpop.permute.xlu0 %594
    %v600 = vmul.f32 %v532, %v589
    %v601 = vmul.f32 %v533, %v591
    %v602 = vmul.f32 %v534, %v593
    %v603 = vmul.f32 %v535, %v595
    %608 = vrot.lane.b32.xlu0 %v600, 64
    %v609 = vpop.permute.xlu0 %608
    %610 = vrot.lane.b32.xlu0 %v601, 64
    %v611 = vpop.permute.xlu0 %610
    %612 = vrot.lane.b32.xlu0 %v602, 64
    %v613 = vpop.permute.xlu0 %612
    %614 = vrot.lane.b32.xlu0 %v603, 64
    %v615 = vpop.permute.xlu0 %614
    %620 = vst.msk [vmem:[#allocation2 + $0x8] sm:$0xff] %vm17, %v609
    %621 = vst.msk [vmem:[#allocation2 + $0x10] sm:$0xff] %vm17, %v611
    %622 = vst.msk [vmem:[#allocation2 + $0x28] sm:$0xff] %vm17, %v613
    %623 = vst.msk [vmem:[#allocation2 + $0x30] sm:$0xff] %vm17, %v615
    %s624 = scalar_lea.vmem [#allocation3], 16
    %625 = vst.msk [vmem:[%s624] sm:$0xff] %vm17, %v609
    %626 = vst.msk [vmem:[%s624 + $0x8] sm:$0xff] %vm17, %v611
    %627 = vst.msk [vmem:[%s624 + $0x80] sm:$0xff] %vm17, %v613
    %628 = vst.msk [vmem:[%s624 + $0x88] sm:$0xff] %vm17, %v615
    %v629 = vld [vmem:[#allocation2 + $0x7] sm:$0xff]
    %v630 = vld [vmem:[#allocation2 + $0xf] sm:$0xff]
    %v631 = vld [vmem:[#allocation2 + $0x27] sm:$0xff]
    %v632 = vld [vmem:[#allocation2 + $0x2f] sm:$0xff]
    %v633 = vld [vmem:[#allocation2 + $0x8] sm:$0xff]
    %v634 = vld [vmem:[#allocation2 + $0x10] sm:$0xff]
    %v635 = vld [vmem:[#allocation2 + $0x28] sm:$0xff]
    %v636 = vld [vmem:[#allocation2 + $0x30] sm:$0xff]
    %v637 = vld [vmem:[#allocation2 + $0x9] sm:$0xff]
    %v638 = vld [vmem:[#allocation2 + $0x11] sm:$0xff]
    %v639 = vld [vmem:[#allocation2 + $0x29] sm:$0xff]
    %v640 = vld [vmem:[#allocation2 + $0x31] sm:$0xff]
    %645 = vrot.lane.b32.xlu0 %v633, 32
    %v646 = vpop.permute.xlu0 %645
    %647 = vrot.lane.b32.xlu0 %v634, 32
    %v648 = vpop.permute.xlu0 %647
    %649 = vrot.lane.b32.xlu0 %v635, 32
    %v650 = vpop.permute.xlu0 %649
    %651 = vrot.lane.b32.xlu0 %v636, 32
    %v652 = vpop.permute.xlu0 %651
    %661 = vrot.lane.b32.xlu0 %v637, 64
    %v662 = vpop.permute.xlu0 %661
    %663 = vrot.lane.b32.xlu0 %v638, 64
    %v664 = vpop.permute.xlu0 %663
    %665 = vrot.lane.b32.xlu0 %v639, 64
    %v666 = vpop.permute.xlu0 %665
    %667 = vrot.lane.b32.xlu0 %v640, 64
    %v668 = vpop.permute.xlu0 %667
    %v673 = vsel %vm17, %v629, %v646
    %v674 = vsel %vm17, %v630, %v648
    %v675 = vsel %vm17, %v631, %v650
    %v676 = vsel %vm17, %v632, %v652
    %v677 = vsel %vm79, %v673, %v662
    %v678 = vsel %vm79, %v674, %v664
    %v679 = vsel %vm79, %v675, %v666
    %v680 = vsel %vm79, %v676, %v668
    %v681 = vpack.c.bf16 %v678, %v677
    %v682 = vpack.c.bf16 %v680, %v679
    %s683 = scalar_lea.vmem %s0, 64
    %v684 = vld [vmem:[%s683] sm:$0xff]
    %v685 = vld [vmem:[%s683 + $0x8] sm:$0xff]
    %v686 = vld [vmem:[%s683 + $0x10] sm:$0xff]
    %v687 = vld [vmem:[%s683 + $0x18] sm:$0xff]
    %v688 = vld [vmem:[%s1] sm:$0xf]
    %v689 = vld [vmem:[%s1 + $0x4] sm:$0xf]
    %v690 = vld [vmem:[%s1 + $0x8] sm:$0xf]
    %v691 = vld [vmem:[%s1 + $0xc] sm:$0xf]
    %v692 = vld [vmem:[%s1 + $0x10] sm:$0xf]
    %v693 = vld [vmem:[%s1 + $0x14] sm:$0xf]
    %v694 = vld [vmem:[%s1 + $0x18] sm:$0xf]
    %v695 = vld [vmem:[%s1 + $0x1c] sm:$0xf]
    %v696 = vld [vmem:[%s1 + $0x20] sm:$0xf]
    %v697 = vld [vmem:[%s1 + $0x24] sm:$0xf]
    %v698 = vld [vmem:[%s1 + $0x28] sm:$0xf]
    %v699 = vld [vmem:[%s1 + $0x2c] sm:$0xf]
    %v712 = vunpack.c.l.b16 %v688
    %v713 = vunpack.c.l.b16 %v689
    %v714 = vunpack.c.l.b16 %v690
    %v715 = vunpack.c.l.b16 %v691
    %v716 = vunpack.c.l.b16 %v692
    %v717 = vunpack.c.l.b16 %v693
    %v718 = vunpack.c.l.b16 %v694
    %v719 = vunpack.c.l.b16 %v695
    %v720 = vunpack.c.l.b16 %v696
    %v721 = vunpack.c.l.b16 %v697
    %v722 = vunpack.c.l.b16 %v698
    %v723 = vunpack.c.l.b16 %v699
    %v724 = vpack.c.b16 %v713, %v712
    %v725 = vpack.c.b16 %v715, %v714
    %v726 = vpack.c.b16 %v717, %v716
    %v727 = vpack.c.b16 %v719, %v718
    %v728 = vpack.c.b16 %v721, %v720
    %v729 = vpack.c.b16 %v723, %v722
    %v737 = vsel %vm138, %v681, 0
    %v740 = vsel %vm138, %v682, 0
    %742 = vmatprep.subr.bf16.mxu0 0
    %743 = vmatpush1.bf16.msra.mxu0 0
    %744 = vmatprep.subr.bf16.mxu0 0
    %745 = vmatpush1.bf16.msra.mxu0 0
    %746 = vmatprep.subr.bf16.mxu0 0
    %747 = vmatpush1.bf16.msra.mxu0 %v729
    %748 = vmatprep.subr.bf16.mxu0 0
    %749 = vmatpush1.bf16.msra.mxu0 %v728
    %750 = vmatprep.subr.bf16.mxu0 0
    %751 = vmatpush1.bf16.msra.mxu0 %v727
    %752 = vmatprep.subr.bf16.mxu0 0
    %753 = vmatpush1.bf16.msra.mxu0 %v726
    %754 = vmatprep.subr.bf16.mxu0 0
    %755 = vmatpush1.bf16.msra.mxu0 %v725
    %756 = vmatprep.subr.bf16.mxu0 0
    %757 = vmatpush1.bf16.msra.mxu0 %v724
    %758 = vmatprep.subr.bf16.mxu0 0
    %759 = vmatpush2.bf16.msra.mxu0 0
    %760 = vmatprep.subr.bf16.mxu0 0
    %761 = vmatpush2.bf16.msra.mxu0 0
    %762 = vmatprep.subr.bf16.mxu0 0
    %763 = vmatpush2.bf16.msra.mxu0 0
    %764 = vmatprep.subr.bf16.mxu0 0
    %765 = vmatpush2.bf16.msra.mxu0 0
    %766 = vmatprep.subr.bf16.mxu0 0
    %767 = vmatpush2.bf16.msra.mxu0 0
    %768 = vmatprep.subr.bf16.mxu0 0
    %769 = vmatpush2.bf16.msra.mxu0 0
    %770 = vmatprep.subr.bf16.mxu0 0
    %771 = vmatpush2.bf16.msra.mxu0 0
    %772 = vmatprep.subr.bf16.mxu0 0
    %773 = vmatpush2.bf16.msra.mxu0 0
    %774 = vmatprep.mubr.bf16.mxu0 0
    %775 = vmatmul.mubr.bf16.gmra.mxu0 %v737
    %v776 = vpop.f32.mrf.mxu0
    %v777 = vadd.f32 0.0, %v776
    %v778 = vpop.f32.mrf.mxu0
    %v779 = vpop.f32.mrf.mxu0
    %v780 = vadd.f32 0.0, %v779
    %v781 = vpop.f32.mrf.mxu0
    %782 = vmatprep.mubr.bf16.mxu0 0
    %783 = vmatmul.mubr.bf16.gmra.mxu0 %v740
    %v784 = vpop.f32.mrf.mxu0
    %v785 = vadd.f32 0.0, %v784
    %v786 = vpop.f32.mrf.mxu0
    %v787 = vpop.f32.mrf.mxu0
    %v788 = vadd.f32 0.0, %v787
    %v789 = vpop.f32.mrf.mxu0
    %790 = vdwg.mxu0
    %v791 = vadd.f32 %v684, %v777
    %v792 = vadd.f32 %v685, %v780
    %v793 = vadd.f32 %v686, %v785
    %v794 = vadd.f32 %v687, %v788
    %v795 = vmul.f32 %v791, %v30
    %v796 = vmul.f32 %v792, %v30
    %v797 = vmul.f32 %v793, %v30
    %v798 = vmul.f32 %v794, %v30
    %v799 = vxor.u32 %v795, 2147483648
    %v800 = vxor.u32 %v796, 2147483648
    %v801 = vxor.u32 %v797, 2147483648
    %v802 = vxor.u32 %v798, 2147483648
    %v803 = vmul.f32 %v799, 1.442695
    %v804 = vpow.pop %v803
    %v805 = vmul.f32 %v800, 1.442695
    %v806 = vpow.pop %v805
    %v807 = vmul.f32 %v801, 1.442695
    %v808 = vpow.pop %v807
    %v809 = vmul.f32 %v802, 1.442695
    %v810 = vpow.pop %v809
    %v811 = vadd.f32 %v804, 1.0
    %v812 = vadd.f32 %v806, 1.0
    %v813 = vadd.f32 %v808, 1.0
    %v814 = vadd.f32 %v810, 1.0
    %v815 = vrcp.pop %v811
    %v816 = vmul.f32 1.0, %v815
    %v817 = vrcp.pop %v812
    %v818 = vmul.f32 1.0, %v817
    %v819 = vrcp.pop %v813
    %v820 = vmul.f32 1.0, %v819
    %v821 = vrcp.pop %v814
    %v822 = vmul.f32 1.0, %v821
    %v823 = vadd.f32 %v816, %v816
    %v824 = vadd.f32 %v818, %v818
    %v825 = vadd.f32 %v820, %v820
    %v826 = vadd.f32 %v822, %v822
    %v827 = vsub.f32 %v823, 1.0
    %v828 = vsub.f32 %v824, 1.0
    %v829 = vsub.f32 %v825, 1.0
    %v830 = vsub.f32 %v826, 1.0
    %v831 = vsel %vm29, %v827, %v816
    %v832 = vsel %vm29, %v828, %v818
    %v833 = vsel %vm29, %v829, %v820
    %v834 = vsel %vm29, %v830, %v822
    %v835 = vmul.f32 %v831, %v576
    %v836 = vmul.f32 %v832, %v577
    %v837 = vmul.f32 %v833, %v578
    %v838 = vmul.f32 %v834, %v579
    %843 = vrot.lane.b32.xlu0 %v831, 32
    %v844 = vpop.permute.xlu0 %843
    %845 = vrot.lane.b32.xlu0 %v832, 32
    %v846 = vpop.permute.xlu0 %845
    %847 = vrot.lane.b32.xlu0 %v833, 32
    %v848 = vpop.permute.xlu0 %847
    %849 = vrot.lane.b32.xlu0 %v834, 32
    %v850 = vpop.permute.xlu0 %849
    %v855 = vmul.f32 %v831, %v844
    %v856 = vmul.f32 %v832, %v846
    %v857 = vmul.f32 %v833, %v848
    %v858 = vmul.f32 %v834, %v850
    %863 = vrot.lane.b32.xlu0 %v855, 32
    %v864 = vpop.permute.xlu0 %863
    %865 = vrot.lane.b32.xlu0 %v856, 32
    %v866 = vpop.permute.xlu0 %865
    %867 = vrot.lane.b32.xlu0 %v857, 32
    %v868 = vpop.permute.xlu0 %867
    %869 = vrot.lane.b32.xlu0 %v858, 32
    %v870 = vpop.permute.xlu0 %869
    %v875 = vadd.f32 %v835, %v864
    %v876 = vadd.f32 %v836, %v866
    %v877 = vadd.f32 %v837, %v868
    %v878 = vadd.f32 %v838, %v870
    %v879 = vtanh.pop %v875
    %v880 = vtanh.pop %v876
    %v881 = vtanh.pop %v877
    %v882 = vtanh.pop %v878
    %887 = vrot.lane.b32.xlu0 %v879, 32
    %v888 = vpop.permute.xlu0 %887
    %889 = vrot.lane.b32.xlu0 %v880, 32
    %v890 = vpop.permute.xlu0 %889
    %891 = vrot.lane.b32.xlu0 %v881, 32
    %v892 = vpop.permute.xlu0 %891
    %893 = vrot.lane.b32.xlu0 %v882, 32
    %v894 = vpop.permute.xlu0 %893
    %v899 = vmul.f32 %v831, %v888
    %v900 = vmul.f32 %v832, %v890
    %v901 = vmul.f32 %v833, %v892
    %v902 = vmul.f32 %v834, %v894
    %907 = vrot.lane.b32.xlu0 %v899, 64
    %v908 = vpop.permute.xlu0 %907
    %909 = vrot.lane.b32.xlu0 %v900, 64
    %v910 = vpop.permute.xlu0 %909
    %911 = vrot.lane.b32.xlu0 %v901, 64
    %v912 = vpop.permute.xlu0 %911
    %913 = vrot.lane.b32.xlu0 %v902, 64
    %v914 = vpop.permute.xlu0 %913
    %919 = vst.msk [vmem:[#allocation2 + $0x8] sm:$0xff] %vm17, %v908
    %920 = vst.msk [vmem:[#allocation2 + $0x10] sm:$0xff] %vm17, %v910
    %921 = vst.msk [vmem:[#allocation2 + $0x28] sm:$0xff] %vm17, %v912
    %922 = vst.msk [vmem:[#allocation2 + $0x30] sm:$0xff] %vm17, %v914
    %s923 = scalar_lea.vmem [#allocation3], 32
    %924 = vst.msk [vmem:[%s923] sm:$0xff] %vm17, %v908
    %925 = vst.msk [vmem:[%s923 + $0x8] sm:$0xff] %vm17, %v910
    %926 = vst.msk [vmem:[%s923 + $0x80] sm:$0xff] %vm17, %v912
    %927 = vst.msk [vmem:[%s923 + $0x88] sm:$0xff] %vm17, %v914
    %v928 = vld [vmem:[#allocation2 + $0x7] sm:$0xff]
    %v929 = vld [vmem:[#allocation2 + $0xf] sm:$0xff]
    %v930 = vld [vmem:[#allocation2 + $0x27] sm:$0xff]
    %v931 = vld [vmem:[#allocation2 + $0x2f] sm:$0xff]
    %v932 = vld [vmem:[#allocation2 + $0x8] sm:$0xff]
    %v933 = vld [vmem:[#allocation2 + $0x10] sm:$0xff]
    %v934 = vld [vmem:[#allocation2 + $0x28] sm:$0xff]
    %v935 = vld [vmem:[#allocation2 + $0x30] sm:$0xff]
    %v936 = vld [vmem:[#allocation2 + $0x9] sm:$0xff]
    %v937 = vld [vmem:[#allocation2 + $0x11] sm:$0xff]
    %v938 = vld [vmem:[#allocation2 + $0x29] sm:$0xff]
    %v939 = vld [vmem:[#allocation2 + $0x31] sm:$0xff]
    %944 = vrot.lane.b32.xlu0 %v932, 32
    %v945 = vpop.permute.xlu0 %944
    %946 = vrot.lane.b32.xlu0 %v933, 32
    %v947 = vpop.permute.xlu0 %946
    %948 = vrot.lane.b32.xlu0 %v934, 32
    %v949 = vpop.permute.xlu0 %948
    %950 = vrot.lane.b32.xlu0 %v935, 32
    %v951 = vpop.permute.xlu0 %950
    %960 = vrot.lane.b32.xlu0 %v936, 64
    %v961 = vpop.permute.xlu0 %960
    %962 = vrot.lane.b32.xlu0 %v937, 64
    %v963 = vpop.permute.xlu0 %962
    %964 = vrot.lane.b32.xlu0 %v938, 64
    %v965 = vpop.permute.xlu0 %964
    %966 = vrot.lane.b32.xlu0 %v939, 64
    %v967 = vpop.permute.xlu0 %966
    %v972 = vsel %vm17, %v928, %v945
    %v973 = vsel %vm17, %v929, %v947
    %v974 = vsel %vm17, %v930, %v949
    %v975 = vsel %vm17, %v931, %v951
    %v976 = vsel %vm79, %v972, %v961
    %v977 = vsel %vm79, %v973, %v963
    %v978 = vsel %vm79, %v974, %v965
    %v979 = vsel %vm79, %v975, %v967
    %v980 = vpack.c.bf16 %v977, %v976
    %v981 = vpack.c.bf16 %v979, %v978
    %s982 = scalar_lea.vmem %s0, 96
    %v983 = vld [vmem:[%s982] sm:$0xff]
    %v984 = vld [vmem:[%s982 + $0x8] sm:$0xff]
    %v985 = vld [vmem:[%s982 + $0x10] sm:$0xff]
    %v986 = vld [vmem:[%s982 + $0x18] sm:$0xff]
    %v987 = vld [vmem:[%s1] sm:$0xf]
    %v988 = vld [vmem:[%s1 + $0x4] sm:$0xf]
    %v989 = vld [vmem:[%s1 + $0x8] sm:$0xf]
    %v990 = vld [vmem:[%s1 + $0xc] sm:$0xf]
    %v991 = vld [vmem:[%s1 + $0x10] sm:$0xf]
    %v992 = vld [vmem:[%s1 + $0x14] sm:$0xf]
    %v993 = vld [vmem:[%s1 + $0x18] sm:$0xf]
    %v994 = vld [vmem:[%s1 + $0x1c] sm:$0xf]
    %v995 = vld [vmem:[%s1 + $0x20] sm:$0xf]
    %v996 = vld [vmem:[%s1 + $0x24] sm:$0xf]
    %v997 = vld [vmem:[%s1 + $0x28] sm:$0xf]
    %v998 = vld [vmem:[%s1 + $0x2c] sm:$0xf]
    %v1011 = vunpack.c.l.b16 %v987
    %v1012 = vunpack.c.l.b16 %v988
    %v1013 = vunpack.c.l.b16 %v989
    %v1014 = vunpack.c.l.b16 %v990
    %v1015 = vunpack.c.l.b16 %v991
    %v1016 = vunpack.c.l.b16 %v992
    %v1017 = vunpack.c.l.b16 %v993
    %v1018 = vunpack.c.l.b16 %v994
    %v1019 = vunpack.c.l.b16 %v995
    %v1020 = vunpack.c.l.b16 %v996
    %v1021 = vunpack.c.l.b16 %v997
    %v1022 = vunpack.c.l.b16 %v998
    %v1023 = vpack.c.b16 %v1012, %v1011
    %v1024 = vpack.c.b16 %v1014, %v1013
    %v1025 = vpack.c.b16 %v1016, %v1015
    %v1026 = vpack.c.b16 %v1018, %v1017
    %v1027 = vpack.c.b16 %v1020, %v1019
    %v1028 = vpack.c.b16 %v1022, %v1021
    %v1036 = vsel %vm138, %v980, 0
    %v1039 = vsel %vm138, %v981, 0
    %1041 = vmatprep.subr.bf16.mxu0 0
    %1042 = vmatpush1.bf16.msra.mxu0 0
    %1043 = vmatprep.subr.bf16.mxu0 0
    %1044 = vmatpush1.bf16.msra.mxu0 0
    %1045 = vmatprep.subr.bf16.mxu0 0
    %1046 = vmatpush1.bf16.msra.mxu0 %v1028
    %1047 = vmatprep.subr.bf16.mxu0 0
    %1048 = vmatpush1.bf16.msra.mxu0 %v1027
    %1049 = vmatprep.subr.bf16.mxu0 0
    %1050 = vmatpush1.bf16.msra.mxu0 %v1026
    %1051 = vmatprep.subr.bf16.mxu0 0
    %1052 = vmatpush1.bf16.msra.mxu0 %v1025
    %1053 = vmatprep.subr.bf16.mxu0 0
    %1054 = vmatpush1.bf16.msra.mxu0 %v1024
    %1055 = vmatprep.subr.bf16.mxu0 0
    %1056 = vmatpush1.bf16.msra.mxu0 %v1023
    %1057 = vmatprep.subr.bf16.mxu0 0
    %1058 = vmatpush2.bf16.msra.mxu0 0
    %1059 = vmatprep.subr.bf16.mxu0 0
    %1060 = vmatpush2.bf16.msra.mxu0 0
    %1061 = vmatprep.subr.bf16.mxu0 0
    %1062 = vmatpush2.bf16.msra.mxu0 0
    %1063 = vmatprep.subr.bf16.mxu0 0
    %1064 = vmatpush2.bf16.msra.mxu0 0
    %1065 = vmatprep.subr.bf16.mxu0 0
    %1066 = vmatpush2.bf16.msra.mxu0 0
    %1067 = vmatprep.subr.bf16.mxu0 0
    %1068 = vmatpush2.bf16.msra.mxu0 0
    %1069 = vmatprep.subr.bf16.mxu0 0
    %1070 = vmatpush2.bf16.msra.mxu0 0
    %1071 = vmatprep.subr.bf16.mxu0 0
    %1072 = vmatpush2.bf16.msra.mxu0 0
    %1073 = vmatprep.mubr.bf16.mxu0 0
    %1074 = vmatmul.mubr.bf16.gmra.mxu0 %v1036
    %v1075 = vpop.f32.mrf.mxu0
    %v1076 = vadd.f32 0.0, %v1075
    %v1077 = vpop.f32.mrf.mxu0
    %v1078 = vpop.f32.mrf.mxu0
    %v1079 = vadd.f32 0.0, %v1078
    %v1080 = vpop.f32.mrf.mxu0
    %1081 = vmatprep.mubr.bf16.mxu0 0
    %1082 = vmatmul.mubr.bf16.gmra.mxu0 %v1039
    %v1083 = vpop.f32.mrf.mxu0
    %v1084 = vadd.f32 0.0, %v1083
    %v1085 = vpop.f32.mrf.mxu0
    %v1086 = vpop.f32.mrf.mxu0
    %v1087 = vadd.f32 0.0, %v1086
    %v1088 = vpop.f32.mrf.mxu0
    %1089 = vdwg.mxu0
    %v1090 = vadd.f32 %v983, %v1076
    %v1091 = vadd.f32 %v984, %v1079
    %v1092 = vadd.f32 %v985, %v1084
    %v1093 = vadd.f32 %v986, %v1087
    %v1094 = vmul.f32 %v1090, %v30
    %v1095 = vmul.f32 %v1091, %v30
    %v1096 = vmul.f32 %v1092, %v30
    %v1097 = vmul.f32 %v1093, %v30
    %v1098 = vxor.u32 %v1094, 2147483648
    %v1099 = vxor.u32 %v1095, 2147483648
    %v1100 = vxor.u32 %v1096, 2147483648
    %v1101 = vxor.u32 %v1097, 2147483648
    %v1102 = vmul.f32 %v1098, 1.442695
    %v1103 = vpow.pop %v1102
    %v1104 = vmul.f32 %v1099, 1.442695
    %v1105 = vpow.pop %v1104
    %v1106 = vmul.f32 %v1100, 1.442695
    %v1107 = vpow.pop %v1106
    %v1108 = vmul.f32 %v1101, 1.442695
    %v1109 = vpow.pop %v1108
    %v1110 = vadd.f32 %v1103, 1.0
    %v1111 = vadd.f32 %v1105, 1.0
    %v1112 = vadd.f32 %v1107, 1.0
    %v1113 = vadd.f32 %v1109, 1.0
    %v1114 = vrcp.pop %v1110
    %v1115 = vmul.f32 1.0, %v1114
    %v1116 = vrcp.pop %v1111
    %v1117 = vmul.f32 1.0, %v1116
    %v1118 = vrcp.pop %v1112
    %v1119 = vmul.f32 1.0, %v1118
    %v1120 = vrcp.pop %v1113
    %v1121 = vmul.f32 1.0, %v1120
    %v1122 = vadd.f32 %v1115, %v1115
    %v1123 = vadd.f32 %v1117, %v1117
    %v1124 = vadd.f32 %v1119, %v1119
    %v1125 = vadd.f32 %v1121, %v1121
    %v1126 = vsub.f32 %v1122, 1.0
    %v1127 = vsub.f32 %v1123, 1.0
    %v1128 = vsub.f32 %v1124, 1.0
    %v1129 = vsub.f32 %v1125, 1.0
    %v1130 = vsel %vm29, %v1126, %v1115
    %v1131 = vsel %vm29, %v1127, %v1117
    %v1132 = vsel %vm29, %v1128, %v1119
    %v1133 = vsel %vm29, %v1129, %v1121
    %v1134 = vmul.f32 %v1130, %v875
    %v1135 = vmul.f32 %v1131, %v876
    %v1136 = vmul.f32 %v1132, %v877
    %v1137 = vmul.f32 %v1133, %v878
    %1142 = vrot.lane.b32.xlu0 %v1130, 32
    %v1143 = vpop.permute.xlu0 %1142
    %1144 = vrot.lane.b32.xlu0 %v1131, 32
    %v1145 = vpop.permute.xlu0 %1144
    %1146 = vrot.lane.b32.xlu0 %v1132, 32
    %v1147 = vpop.permute.xlu0 %1146
    %1148 = vrot.lane.b32.xlu0 %v1133, 32
    %v1149 = vpop.permute.xlu0 %1148
    %v1154 = vmul.f32 %v1130, %v1143
    %v1155 = vmul.f32 %v1131, %v1145
    %v1156 = vmul.f32 %v1132, %v1147
    %v1157 = vmul.f32 %v1133, %v1149
    %1162 = vrot.lane.b32.xlu0 %v1154, 32
    %v1163 = vpop.permute.xlu0 %1162
    %1164 = vrot.lane.b32.xlu0 %v1155, 32
    %v1165 = vpop.permute.xlu0 %1164
    %1166 = vrot.lane.b32.xlu0 %v1156, 32
    %v1167 = vpop.permute.xlu0 %1166
    %1168 = vrot.lane.b32.xlu0 %v1157, 32
    %v1169 = vpop.permute.xlu0 %1168
    %v1174 = vadd.f32 %v1134, %v1163
    %v1175 = vadd.f32 %v1135, %v1165
    %v1176 = vadd.f32 %v1136, %v1167
    %v1177 = vadd.f32 %v1137, %v1169
    %v1178 = vtanh.pop %v1174
    %v1179 = vtanh.pop %v1175
    %v1180 = vtanh.pop %v1176
    %v1181 = vtanh.pop %v1177
    %1186 = vrot.lane.b32.xlu0 %v1178, 32
    %v1187 = vpop.permute.xlu0 %1186
    %1188 = vrot.lane.b32.xlu0 %v1179, 32
    %v1189 = vpop.permute.xlu0 %1188
    %1190 = vrot.lane.b32.xlu0 %v1180, 32
    %v1191 = vpop.permute.xlu0 %1190
    %1192 = vrot.lane.b32.xlu0 %v1181, 32
    %v1193 = vpop.permute.xlu0 %1192
    %v1198 = vmul.f32 %v1130, %v1187
    %v1199 = vmul.f32 %v1131, %v1189
    %v1200 = vmul.f32 %v1132, %v1191
    %v1201 = vmul.f32 %v1133, %v1193
    %1206 = vrot.lane.b32.xlu0 %v1198, 64
    %v1207 = vpop.permute.xlu0 %1206
    %1208 = vrot.lane.b32.xlu0 %v1199, 64
    %v1209 = vpop.permute.xlu0 %1208
    %1210 = vrot.lane.b32.xlu0 %v1200, 64
    %v1211 = vpop.permute.xlu0 %1210
    %1212 = vrot.lane.b32.xlu0 %v1201, 64
    %v1213 = vpop.permute.xlu0 %1212
    %1218 = vst.msk [vmem:[#allocation2 + $0x8] sm:$0xff] %vm17, %v1207
    %1219 = vst.msk [vmem:[#allocation2 + $0x10] sm:$0xff] %vm17, %v1209
    %1220 = vst.msk [vmem:[#allocation2 + $0x28] sm:$0xff] %vm17, %v1211
    %1221 = vst.msk [vmem:[#allocation2 + $0x30] sm:$0xff] %vm17, %v1213
    %s1222 = scalar_lea.vmem [#allocation3], 48
    %1223 = vst.msk [vmem:[%s1222] sm:$0xff] %vm17, %v1207
    %1224 = vst.msk [vmem:[%s1222 + $0x8] sm:$0xff] %vm17, %v1209
    %1225 = vst.msk [vmem:[%s1222 + $0x80] sm:$0xff] %vm17, %v1211
    %1226 = vst.msk [vmem:[%s1222 + $0x88] sm:$0xff] %vm17, %v1213
    %v1227 = vld [vmem:[#allocation2 + $0x7] sm:$0xff]
    %v1228 = vld [vmem:[#allocation2 + $0xf] sm:$0xff]
    %v1229 = vld [vmem:[#allocation2 + $0x27] sm:$0xff]
    %v1230 = vld [vmem:[#allocation2 + $0x2f] sm:$0xff]
    %v1231 = vld [vmem:[#allocation2 + $0x8] sm:$0xff]
    %v1232 = vld [vmem:[#allocation2 + $0x10] sm:$0xff]
    %v1233 = vld [vmem:[#allocation2 + $0x28] sm:$0xff]
    %v1234 = vld [vmem:[#allocation2 + $0x30] sm:$0xff]
    %v1235 = vld [vmem:[#allocation2 + $0x9] sm:$0xff]
    %v1236 = vld [vmem:[#allocation2 + $0x11] sm:$0xff]
    %v1237 = vld [vmem:[#allocation2 + $0x29] sm:$0xff]
    %v1238 = vld [vmem:[#allocation2 + $0x31] sm:$0xff]
    %1243 = vrot.lane.b32.xlu0 %v1231, 32
    %v1244 = vpop.permute.xlu0 %1243
    %1245 = vrot.lane.b32.xlu0 %v1232, 32
    %v1246 = vpop.permute.xlu0 %1245
    %1247 = vrot.lane.b32.xlu0 %v1233, 32
    %v1248 = vpop.permute.xlu0 %1247
    %1249 = vrot.lane.b32.xlu0 %v1234, 32
    %v1250 = vpop.permute.xlu0 %1249
    %1259 = vrot.lane.b32.xlu0 %v1235, 64
    %v1260 = vpop.permute.xlu0 %1259
    %1261 = vrot.lane.b32.xlu0 %v1236, 64
    %v1262 = vpop.permute.xlu0 %1261
    %1263 = vrot.lane.b32.xlu0 %v1237, 64
    %v1264 = vpop.permute.xlu0 %1263
    %1265 = vrot.lane.b32.xlu0 %v1238, 64
    %v1266 = vpop.permute.xlu0 %1265
    %v1271 = vsel %vm17, %v1227, %v1244
    %v1272 = vsel %vm17, %v1228, %v1246
    %v1273 = vsel %vm17, %v1229, %v1248
    %v1274 = vsel %vm17, %v1230, %v1250
    %v1275 = vsel %vm79, %v1271, %v1260
    %v1276 = vsel %vm79, %v1272, %v1262
    %v1277 = vsel %vm79, %v1273, %v1264
    %v1278 = vsel %vm79, %v1274, %v1266
    %v1279 = vpack.c.bf16 %v1276, %v1275
    %v1280 = vpack.c.bf16 %v1278, %v1277
    %s1281 = scalar_lea.vmem %s0, 128
    %v1282 = vld [vmem:[%s1281] sm:$0xff]
    %v1283 = vld [vmem:[%s1281 + $0x8] sm:$0xff]
    %v1284 = vld [vmem:[%s1281 + $0x10] sm:$0xff]
    %v1285 = vld [vmem:[%s1281 + $0x18] sm:$0xff]
    %v1286 = vld [vmem:[%s1] sm:$0xf]
    %v1287 = vld [vmem:[%s1 + $0x4] sm:$0xf]
    %v1288 = vld [vmem:[%s1 + $0x8] sm:$0xf]
    %v1289 = vld [vmem:[%s1 + $0xc] sm:$0xf]
    %v1290 = vld [vmem:[%s1 + $0x10] sm:$0xf]
    %v1291 = vld [vmem:[%s1 + $0x14] sm:$0xf]
    %v1292 = vld [vmem:[%s1 + $0x18] sm:$0xf]
    %v1293 = vld [vmem:[%s1 + $0x1c] sm:$0xf]
    %v1294 = vld [vmem:[%s1 + $0x20] sm:$0xf]
    %v1295 = vld [vmem:[%s1 + $0x24] sm:$0xf]
    %v1296 = vld [vmem:[%s1 + $0x28] sm:$0xf]
    %v1297 = vld [vmem:[%s1 + $0x2c] sm:$0xf]
    %v1310 = vunpack.c.l.b16 %v1286
    %v1311 = vunpack.c.l.b16 %v1287
    %v1312 = vunpack.c.l.b16 %v1288
    %v1313 = vunpack.c.l.b16 %v1289
    %v1314 = vunpack.c.l.b16 %v1290
    %v1315 = vunpack.c.l.b16 %v1291
    %v1316 = vunpack.c.l.b16 %v1292
    %v1317 = vunpack.c.l.b16 %v1293
    %v1318 = vunpack.c.l.b16 %v1294
    %v1319 = vunpack.c.l.b16 %v1295
    %v1320 = vunpack.c.l.b16 %v1296
    %v1321 = vunpack.c.l.b16 %v1297
    %v1322 = vpack.c.b16 %v1311, %v1310
    %v1323 = vpack.c.b16 %v1313, %v1312
    %v1324 = vpack.c.b16 %v1315, %v1314
    %v1325 = vpack.c.b16 %v1317, %v1316
    %v1326 = vpack.c.b16 %v1319, %v1318
    %v1327 = vpack.c.b16 %v1321, %v1320
    %v1335 = vsel %vm138, %v1279, 0
    %v1338 = vsel %vm138, %v1280, 0
    %1340 = vmatprep.subr.bf16.mxu0 0
    %1341 = vmatpush1.bf16.msra.mxu0 0
    %1342 = vmatprep.subr.bf16.mxu0 0
    %1343 = vmatpush1.bf16.msra.mxu0 0
    %1344 = vmatprep.subr.bf16.mxu0 0
    %1345 = vmatpush1.bf16.msra.mxu0 %v1327
    %1346 = vmatprep.subr.bf16.mxu0 0
    %1347 = vmatpush1.bf16.msra.mxu0 %v1326
    %1348 = vmatprep.subr.bf16.mxu0 0
    %1349 = vmatpush1.bf16.msra.mxu0 %v1325
    %1350 = vmatprep.subr.bf16.mxu0 0
    %1351 = vmatpush1.bf16.msra.mxu0 %v1324
    %1352 = vmatprep.subr.bf16.mxu0 0
    %1353 = vmatpush1.bf16.msra.mxu0 %v1323
    %1354 = vmatprep.subr.bf16.mxu0 0
    %1355 = vmatpush1.bf16.msra.mxu0 %v1322
    %1356 = vmatprep.subr.bf16.mxu0 0
    %1357 = vmatpush2.bf16.msra.mxu0 0
    %1358 = vmatprep.subr.bf16.mxu0 0
    %1359 = vmatpush2.bf16.msra.mxu0 0
    %1360 = vmatprep.subr.bf16.mxu0 0
    %1361 = vmatpush2.bf16.msra.mxu0 0
    %1362 = vmatprep.subr.bf16.mxu0 0
    %1363 = vmatpush2.bf16.msra.mxu0 0
    %1364 = vmatprep.subr.bf16.mxu0 0
    %1365 = vmatpush2.bf16.msra.mxu0 0
    %1366 = vmatprep.subr.bf16.mxu0 0
    %1367 = vmatpush2.bf16.msra.mxu0 0
    %1368 = vmatprep.subr.bf16.mxu0 0
    %1369 = vmatpush2.bf16.msra.mxu0 0
    %1370 = vmatprep.subr.bf16.mxu0 0
    %1371 = vmatpush2.bf16.msra.mxu0 0
    %1372 = vmatprep.mubr.bf16.mxu0 0
    %1373 = vmatmul.mubr.bf16.gmra.mxu0 %v1335
    %v1374 = vpop.f32.mrf.mxu0
    %v1375 = vadd.f32 0.0, %v1374
    %v1376 = vpop.f32.mrf.mxu0
    %v1377 = vpop.f32.mrf.mxu0
    %v1378 = vadd.f32 0.0, %v1377
    %v1379 = vpop.f32.mrf.mxu0
    %1380 = vmatprep.mubr.bf16.mxu0 0
    %1381 = vmatmul.mubr.bf16.gmra.mxu0 %v1338
    %v1382 = vpop.f32.mrf.mxu0
    %v1383 = vadd.f32 0.0, %v1382
    %v1384 = vpop.f32.mrf.mxu0
    %v1385 = vpop.f32.mrf.mxu0
    %v1386 = vadd.f32 0.0, %v1385
    %v1387 = vpop.f32.mrf.mxu0
    %1388 = vdwg.mxu0
    %v1389 = vadd.f32 %v1282, %v1375
    %v1390 = vadd.f32 %v1283, %v1378
    %v1391 = vadd.f32 %v1284, %v1383
    %v1392 = vadd.f32 %v1285, %v1386
    %v1393 = vmul.f32 %v1389, %v30
    %v1394 = vmul.f32 %v1390, %v30
    %v1395 = vmul.f32 %v1391, %v30
    %v1396 = vmul.f32 %v1392, %v30
    %v1397 = vxor.u32 %v1393, 2147483648
    %v1398 = vxor.u32 %v1394, 2147483648
    %v1399 = vxor.u32 %v1395, 2147483648
    %v1400 = vxor.u32 %v1396, 2147483648
    %v1401 = vmul.f32 %v1397, 1.442695
    %v1402 = vpow.pop %v1401
    %v1403 = vmul.f32 %v1398, 1.442695
    %v1404 = vpow.pop %v1403
    %v1405 = vmul.f32 %v1399, 1.442695
    %v1406 = vpow.pop %v1405
    %v1407 = vmul.f32 %v1400, 1.442695
    %v1408 = vpow.pop %v1407
    %v1409 = vadd.f32 %v1402, 1.0
    %v1410 = vadd.f32 %v1404, 1.0
    %v1411 = vadd.f32 %v1406, 1.0
    %v1412 = vadd.f32 %v1408, 1.0
    %v1413 = vrcp.pop %v1409
    %v1414 = vmul.f32 1.0, %v1413
    %v1415 = vrcp.pop %v1410
    %v1416 = vmul.f32 1.0, %v1415
    %v1417 = vrcp.pop %v1411
    %v1418 = vmul.f32 1.0, %v1417
    %v1419 = vrcp.pop %v1412
    %v1420 = vmul.f32 1.0, %v1419
    %v1421 = vadd.f32 %v1414, %v1414
    %v1422 = vadd.f32 %v1416, %v1416
    %v1423 = vadd.f32 %v1418, %v1418
    %v1424 = vadd.f32 %v1420, %v1420
    %v1425 = vsub.f32 %v1421, 1.0
    %v1426 = vsub.f32 %v1422, 1.0
    %v1427 = vsub.f32 %v1423, 1.0
    %v1428 = vsub.f32 %v1424, 1.0
    %v1429 = vsel %vm29, %v1425, %v1414
    %v1430 = vsel %vm29, %v1426, %v1416
    %v1431 = vsel %vm29, %v1427, %v1418
    %v1432 = vsel %vm29, %v1428, %v1420
    %v1433 = vmul.f32 %v1429, %v1174
    %v1434 = vmul.f32 %v1430, %v1175
    %v1435 = vmul.f32 %v1431, %v1176
    %v1436 = vmul.f32 %v1432, %v1177
    %1441 = vrot.lane.b32.xlu0 %v1429, 32
    %v1442 = vpop.permute.xlu0 %1441
    %1443 = vrot.lane.b32.xlu0 %v1430, 32
    %v1444 = vpop.permute.xlu0 %1443
    %1445 = vrot.lane.b32.xlu0 %v1431, 32
    %v1446 = vpop.permute.xlu0 %1445
    %1447 = vrot.lane.b32.xlu0 %v1432, 32
    %v1448 = vpop.permute.xlu0 %1447
    %v1453 = vmul.f32 %v1429, %v1442
    %v1454 = vmul.f32 %v1430, %v1444
    %v1455 = vmul.f32 %v1431, %v1446
    %v1456 = vmul.f32 %v1432, %v1448
    %1461 = vrot.lane.b32.xlu0 %v1453, 32
    %v1462 = vpop.permute.xlu0 %1461
    %1463 = vrot.lane.b32.xlu0 %v1454, 32
    %v1464 = vpop.permute.xlu0 %1463
    %1465 = vrot.lane.b32.xlu0 %v1455, 32
    %v1466 = vpop.permute.xlu0 %1465
    %1467 = vrot.lane.b32.xlu0 %v1456, 32
    %v1468 = vpop.permute.xlu0 %1467
    %v1473 = vadd.f32 %v1433, %v1462
    %v1474 = vadd.f32 %v1434, %v1464
    %v1475 = vadd.f32 %v1435, %v1466
    %v1476 = vadd.f32 %v1436, %v1468
    %v1477 = vtanh.pop %v1473
    %v1478 = vtanh.pop %v1474
    %v1479 = vtanh.pop %v1475
    %v1480 = vtanh.pop %v1476
    %1485 = vrot.lane.b32.xlu0 %v1477, 32
    %v1486 = vpop.permute.xlu0 %1485
    %1487 = vrot.lane.b32.xlu0 %v1478, 32
    %v1488 = vpop.permute.xlu0 %1487
    %1489 = vrot.lane.b32.xlu0 %v1479, 32
    %v1490 = vpop.permute.xlu0 %1489
    %1491 = vrot.lane.b32.xlu0 %v1480, 32
    %v1492 = vpop.permute.xlu0 %1491
    %v1497 = vmul.f32 %v1429, %v1486
    %v1498 = vmul.f32 %v1430, %v1488
    %v1499 = vmul.f32 %v1431, %v1490
    %v1500 = vmul.f32 %v1432, %v1492
    %1505 = vrot.lane.b32.xlu0 %v1497, 64
    %v1506 = vpop.permute.xlu0 %1505
    %1507 = vrot.lane.b32.xlu0 %v1498, 64
    %v1508 = vpop.permute.xlu0 %1507
    %1509 = vrot.lane.b32.xlu0 %v1499, 64
    %v1510 = vpop.permute.xlu0 %1509
    %1511 = vrot.lane.b32.xlu0 %v1500, 64
    %v1512 = vpop.permute.xlu0 %1511
    %1517 = vst.msk [vmem:[#allocation2 + $0x8] sm:$0xff] %vm17, %v1506
    %1518 = vst.msk [vmem:[#allocation2 + $0x10] sm:$0xff] %vm17, %v1508
    %1519 = vst.msk [vmem:[#allocation2 + $0x28] sm:$0xff] %vm17, %v1510
    %1520 = vst.msk [vmem:[#allocation2 + $0x30] sm:$0xff] %vm17, %v1512
    %s1521 = scalar_lea.vmem [#allocation3], 64
    %1522 = vst.msk [vmem:[%s1521] sm:$0xff] %vm17, %v1506
    %1523 = vst.msk [vmem:[%s1521 + $0x8] sm:$0xff] %vm17, %v1508
    %1524 = vst.msk [vmem:[%s1521 + $0x80] sm:$0xff] %vm17, %v1510
    %1525 = vst.msk [vmem:[%s1521 + $0x88] sm:$0xff] %vm17, %v1512
    %v1526 = vld [vmem:[#allocation2 + $0x7] sm:$0xff]
    %v1527 = vld [vmem:[#allocation2 + $0xf] sm:$0xff]
    %v1528 = vld [vmem:[#allocation2 + $0x27] sm:$0xff]
    %v1529 = vld [vmem:[#allocation2 + $0x2f] sm:$0xff]
    %v1530 = vld [vmem:[#allocation2 + $0x8] sm:$0xff]
    %v1531 = vld [vmem:[#allocation2 + $0x10] sm:$0xff]
    %v1532 = vld [vmem:[#allocation2 + $0x28] sm:$0xff]
    %v1533 = vld [vmem:[#allocation2 + $0x30] sm:$0xff]
    %v1534 = vld [vmem:[#allocation2 + $0x9] sm:$0xff]
    %v1535 = vld [vmem:[#allocation2 + $0x11] sm:$0xff]
    %v1536 = vld [vmem:[#allocation2 + $0x29] sm:$0xff]
    %v1537 = vld [vmem:[#allocation2 + $0x31] sm:$0xff]
    %1542 = vrot.lane.b32.xlu0 %v1530, 32
    %v1543 = vpop.permute.xlu0 %1542
    %1544 = vrot.lane.b32.xlu0 %v1531, 32
    %v1545 = vpop.permute.xlu0 %1544
    %1546 = vrot.lane.b32.xlu0 %v1532, 32
    %v1547 = vpop.permute.xlu0 %1546
    %1548 = vrot.lane.b32.xlu0 %v1533, 32
    %v1549 = vpop.permute.xlu0 %1548
    %1558 = vrot.lane.b32.xlu0 %v1534, 64
    %v1559 = vpop.permute.xlu0 %1558
    %1560 = vrot.lane.b32.xlu0 %v1535, 64
    %v1561 = vpop.permute.xlu0 %1560
    %1562 = vrot.lane.b32.xlu0 %v1536, 64
    %v1563 = vpop.permute.xlu0 %1562
    %1564 = vrot.lane.b32.xlu0 %v1537, 64
    %v1565 = vpop.permute.xlu0 %1564
    %v1570 = vsel %vm17, %v1526, %v1543
    %v1571 = vsel %vm17, %v1527, %v1545
    %v1572 = vsel %vm17, %v1528, %v1547
    %v1573 = vsel %vm17, %v1529, %v1549
    %v1574 = vsel %vm79, %v1570, %v1559
    %v1575 = vsel %vm79, %v1571, %v1561
    %v1576 = vsel %vm79, %v1572, %v1563
    %v1577 = vsel %vm79, %v1573, %v1565
    %v1578 = vpack.c.bf16 %v1575, %v1574
    %v1579 = vpack.c.bf16 %v1577, %v1576
    %s1580 = scalar_lea.vmem %s0, 160
    %v1581 = vld [vmem:[%s1580] sm:$0xff]
    %v1582 = vld [vmem:[%s1580 + $0x8] sm:$0xff]
    %v1583 = vld [vmem:[%s1580 + $0x10] sm:$0xff]
    %v1584 = vld [vmem:[%s1580 + $0x18] sm:$0xff]
    %v1585 = vld [vmem:[%s1] sm:$0xf]
    %v1586 = vld [vmem:[%s1 + $0x4] sm:$0xf]
    %v1587 = vld [vmem:[%s1 + $0x8] sm:$0xf]
    %v1588 = vld [vmem:[%s1 + $0xc] sm:$0xf]
    %v1589 = vld [vmem:[%s1 + $0x10] sm:$0xf]
    %v1590 = vld [vmem:[%s1 + $0x14] sm:$0xf]
    %v1591 = vld [vmem:[%s1 + $0x18] sm:$0xf]
    %v1592 = vld [vmem:[%s1 + $0x1c] sm:$0xf]
    %v1593 = vld [vmem:[%s1 + $0x20] sm:$0xf]
    %v1594 = vld [vmem:[%s1 + $0x24] sm:$0xf]
    %v1595 = vld [vmem:[%s1 + $0x28] sm:$0xf]
    %v1596 = vld [vmem:[%s1 + $0x2c] sm:$0xf]
    %v1609 = vunpack.c.l.b16 %v1585
    %v1610 = vunpack.c.l.b16 %v1586
    %v1611 = vunpack.c.l.b16 %v1587
    %v1612 = vunpack.c.l.b16 %v1588
    %v1613 = vunpack.c.l.b16 %v1589
    %v1614 = vunpack.c.l.b16 %v1590
    %v1615 = vunpack.c.l.b16 %v1591
    %v1616 = vunpack.c.l.b16 %v1592
    %v1617 = vunpack.c.l.b16 %v1593
    %v1618 = vunpack.c.l.b16 %v1594
    %v1619 = vunpack.c.l.b16 %v1595
    %v1620 = vunpack.c.l.b16 %v1596
    %v1621 = vpack.c.b16 %v1610, %v1609
    %v1622 = vpack.c.b16 %v1612, %v1611
    %v1623 = vpack.c.b16 %v1614, %v1613
    %v1624 = vpack.c.b16 %v1616, %v1615
    %v1625 = vpack.c.b16 %v1618, %v1617
    %v1626 = vpack.c.b16 %v1620, %v1619
    %v1634 = vsel %vm138, %v1578, 0
    %v1637 = vsel %vm138, %v1579, 0
    %1639 = vmatprep.subr.bf16.mxu0 0
    %1640 = vmatpush1.bf16.msra.mxu0 0
    %1641 = vmatprep.subr.bf16.mxu0 0
    %1642 = vmatpush1.bf16.msra.mxu0 0
    %1643 = vmatprep.subr.bf16.mxu0 0
    %1644 = vmatpush1.bf16.msra.mxu0 %v1626
    %1645 = vmatprep.subr.bf16.mxu0 0
    %1646 = vmatpush1.bf16.msra.mxu0 %v1625
    %1647 = vmatprep.subr.bf16.mxu0 0
    %1648 = vmatpush1.bf16.msra.mxu0 %v1624
    %1649 = vmatprep.subr.bf16.mxu0 0
    %1650 = vmatpush1.bf16.msra.mxu0 %v1623
    %1651 = vmatprep.subr.bf16.mxu0 0
    %1652 = vmatpush1.bf16.msra.mxu0 %v1622
    %1653 = vmatprep.subr.bf16.mxu0 0
    %1654 = vmatpush1.bf16.msra.mxu0 %v1621
    %1655 = vmatprep.subr.bf16.mxu0 0
    %1656 = vmatpush2.bf16.msra.mxu0 0
    %1657 = vmatprep.subr.bf16.mxu0 0
    %1658 = vmatpush2.bf16.msra.mxu0 0
    %1659 = vmatprep.subr.bf16.mxu0 0
    %1660 = vmatpush2.bf16.msra.mxu0 0
    %1661 = vmatprep.subr.bf16.mxu0 0
    %1662 = vmatpush2.bf16.msra.mxu0 0
    %1663 = vmatprep.subr.bf16.mxu0 0
    %1664 = vmatpush2.bf16.msra.mxu0 0
    %1665 = vmatprep.subr.bf16.mxu0 0
    %1666 = vmatpush2.bf16.msra.mxu0 0
    %1667 = vmatprep.subr.bf16.mxu0 0
    %1668 = vmatpush2.bf16.msra.mxu0 0
    %1669 = vmatprep.subr.bf16.mxu0 0
    %1670 = vmatpush2.bf16.msra.mxu0 0
    %1671 = vmatprep.mubr.bf16.mxu0 0
    %1672 = vmatmul.mubr.bf16.gmra.mxu0 %v1634
    %v1673 = vpop.f32.mrf.mxu0
    %v1674 = vadd.f32 0.0, %v1673
    %v1675 = vpop.f32.mrf.mxu0
    %v1676 = vpop.f32.mrf.mxu0
    %v1677 = vadd.f32 0.0, %v1676
    %v1678 = vpop.f32.mrf.mxu0
    %1679 = vmatprep.mubr.bf16.mxu0 0
    %1680 = vmatmul.mubr.bf16.gmra.mxu0 %v1637
    %v1681 = vpop.f32.mrf.mxu0
    %v1682 = vadd.f32 0.0, %v1681
    %v1683 = vpop.f32.mrf.mxu0
    %v1684 = vpop.f32.mrf.mxu0
    %v1685 = vadd.f32 0.0, %v1684
    %v1686 = vpop.f32.mrf.mxu0
    %1687 = vdwg.mxu0
    %v1688 = vadd.f32 %v1581, %v1674
    %v1689 = vadd.f32 %v1582, %v1677
    %v1690 = vadd.f32 %v1583, %v1682
    %v1691 = vadd.f32 %v1584, %v1685
    %v1692 = vmul.f32 %v1688, %v30
    %v1693 = vmul.f32 %v1689, %v30
    %v1694 = vmul.f32 %v1690, %v30
    %v1695 = vmul.f32 %v1691, %v30
    %v1696 = vxor.u32 %v1692, 2147483648
    %v1697 = vxor.u32 %v1693, 2147483648
    %v1698 = vxor.u32 %v1694, 2147483648
    %v1699 = vxor.u32 %v1695, 2147483648
    %v1700 = vmul.f32 %v1696, 1.442695
    %v1701 = vpow.pop %v1700
    %v1702 = vmul.f32 %v1697, 1.442695
    %v1703 = vpow.pop %v1702
    %v1704 = vmul.f32 %v1698, 1.442695
    %v1705 = vpow.pop %v1704
    %v1706 = vmul.f32 %v1699, 1.442695
    %v1707 = vpow.pop %v1706
    %v1708 = vadd.f32 %v1701, 1.0
    %v1709 = vadd.f32 %v1703, 1.0
    %v1710 = vadd.f32 %v1705, 1.0
    %v1711 = vadd.f32 %v1707, 1.0
    %v1712 = vrcp.pop %v1708
    %v1713 = vmul.f32 1.0, %v1712
    %v1714 = vrcp.pop %v1709
    %v1715 = vmul.f32 1.0, %v1714
    %v1716 = vrcp.pop %v1710
    %v1717 = vmul.f32 1.0, %v1716
    %v1718 = vrcp.pop %v1711
    %v1719 = vmul.f32 1.0, %v1718
    %v1720 = vadd.f32 %v1713, %v1713
    %v1721 = vadd.f32 %v1715, %v1715
    %v1722 = vadd.f32 %v1717, %v1717
    %v1723 = vadd.f32 %v1719, %v1719
    %v1724 = vsub.f32 %v1720, 1.0
    %v1725 = vsub.f32 %v1721, 1.0
    %v1726 = vsub.f32 %v1722, 1.0
    %v1727 = vsub.f32 %v1723, 1.0
    %v1728 = vsel %vm29, %v1724, %v1713
    %v1729 = vsel %vm29, %v1725, %v1715
    %v1730 = vsel %vm29, %v1726, %v1717
    %v1731 = vsel %vm29, %v1727, %v1719
    %v1732 = vmul.f32 %v1728, %v1473
    %v1733 = vmul.f32 %v1729, %v1474
    %v1734 = vmul.f32 %v1730, %v1475
    %v1735 = vmul.f32 %v1731, %v1476
    %1740 = vrot.lane.b32.xlu0 %v1728, 32
    %v1741 = vpop.permute.xlu0 %1740
    %1742 = vrot.lane.b32.xlu0 %v1729, 32
    %v1743 = vpop.permute.xlu0 %1742
    %1744 = vrot.lane.b32.xlu0 %v1730, 32
    %v1745 = vpop.permute.xlu0 %1744
    %1746 = vrot.lane.b32.xlu0 %v1731, 32
    %v1747 = vpop.permute.xlu0 %1746
    %v1752 = vmul.f32 %v1728, %v1741
    %v1753 = vmul.f32 %v1729, %v1743
    %v1754 = vmul.f32 %v1730, %v1745
    %v1755 = vmul.f32 %v1731, %v1747
    %1760 = vrot.lane.b32.xlu0 %v1752, 32
    %v1761 = vpop.permute.xlu0 %1760
    %1762 = vrot.lane.b32.xlu0 %v1753, 32
    %v1763 = vpop.permute.xlu0 %1762
    %1764 = vrot.lane.b32.xlu0 %v1754, 32
    %v1765 = vpop.permute.xlu0 %1764
    %1766 = vrot.lane.b32.xlu0 %v1755, 32
    %v1767 = vpop.permute.xlu0 %1766
    %v1772 = vadd.f32 %v1732, %v1761
    %v1773 = vadd.f32 %v1733, %v1763
    %v1774 = vadd.f32 %v1734, %v1765
    %v1775 = vadd.f32 %v1735, %v1767
    %v1776 = vtanh.pop %v1772
    %v1777 = vtanh.pop %v1773
    %v1778 = vtanh.pop %v1774
    %v1779 = vtanh.pop %v1775
    %1784 = vrot.lane.b32.xlu0 %v1776, 32
    %v1785 = vpop.permute.xlu0 %1784
    %1786 = vrot.lane.b32.xlu0 %v1777, 32
    %v1787 = vpop.permute.xlu0 %1786
    %1788 = vrot.lane.b32.xlu0 %v1778, 32
    %v1789 = vpop.permute.xlu0 %1788
    %1790 = vrot.lane.b32.xlu0 %v1779, 32
    %v1791 = vpop.permute.xlu0 %1790
    %v1796 = vmul.f32 %v1728, %v1785
    %v1797 = vmul.f32 %v1729, %v1787
    %v1798 = vmul.f32 %v1730, %v1789
    %v1799 = vmul.f32 %v1731, %v1791
    %1804 = vrot.lane.b32.xlu0 %v1796, 64
    %v1805 = vpop.permute.xlu0 %1804
    %1806 = vrot.lane.b32.xlu0 %v1797, 64
    %v1807 = vpop.permute.xlu0 %1806
    %1808 = vrot.lane.b32.xlu0 %v1798, 64
    %v1809 = vpop.permute.xlu0 %1808
    %1810 = vrot.lane.b32.xlu0 %v1799, 64
    %v1811 = vpop.permute.xlu0 %1810
    %1816 = vst.msk [vmem:[#allocation2 + $0x8] sm:$0xff] %vm17, %v1805
    %1817 = vst.msk [vmem:[#allocation2 + $0x10] sm:$0xff] %vm17, %v1807
    %1818 = vst.msk [vmem:[#allocation2 + $0x28] sm:$0xff] %vm17, %v1809
    %1819 = vst.msk [vmem:[#allocation2 + $0x30] sm:$0xff] %vm17, %v1811
    %s1820 = scalar_lea.vmem [#allocation3], 80
    %1821 = vst.msk [vmem:[%s1820] sm:$0xff] %vm17, %v1805
    %1822 = vst.msk [vmem:[%s1820 + $0x8] sm:$0xff] %vm17, %v1807
    %1823 = vst.msk [vmem:[%s1820 + $0x80] sm:$0xff] %vm17, %v1809
    %1824 = vst.msk [vmem:[%s1820 + $0x88] sm:$0xff] %vm17, %v1811
    %v1825 = vld [vmem:[#allocation2 + $0x7] sm:$0xff]
    %v1826 = vld [vmem:[#allocation2 + $0xf] sm:$0xff]
    %v1827 = vld [vmem:[#allocation2 + $0x27] sm:$0xff]
    %v1828 = vld [vmem:[#allocation2 + $0x2f] sm:$0xff]
    %v1829 = vld [vmem:[#allocation2 + $0x8] sm:$0xff]
    %v1830 = vld [vmem:[#allocation2 + $0x10] sm:$0xff]
    %v1831 = vld [vmem:[#allocation2 + $0x28] sm:$0xff]
    %v1832 = vld [vmem:[#allocation2 + $0x30] sm:$0xff]
    %v1833 = vld [vmem:[#allocation2 + $0x9] sm:$0xff]
    %v1834 = vld [vmem:[#allocation2 + $0x11] sm:$0xff]
    %v1835 = vld [vmem:[#allocation2 + $0x29] sm:$0xff]
    %v1836 = vld [vmem:[#allocation2 + $0x31] sm:$0xff]
    %1841 = vrot.lane.b32.xlu0 %v1829, 32
    %v1842 = vpop.permute.xlu0 %1841
    %1843 = vrot.lane.b32.xlu0 %v1830, 32
    %v1844 = vpop.permute.xlu0 %1843
    %1845 = vrot.lane.b32.xlu0 %v1831, 32
    %v1846 = vpop.permute.xlu0 %1845
    %1847 = vrot.lane.b32.xlu0 %v1832, 32
    %v1848 = vpop.permute.xlu0 %1847
    %1857 = vrot.lane.b32.xlu0 %v1833, 64
    %v1858 = vpop.permute.xlu0 %1857
    %1859 = vrot.lane.b32.xlu0 %v1834, 64
    %v1860 = vpop.permute.xlu0 %1859
    %1861 = vrot.lane.b32.xlu0 %v1835, 64
    %v1862 = vpop.permute.xlu0 %1861
    %1863 = vrot.lane.b32.xlu0 %v1836, 64
    %v1864 = vpop.permute.xlu0 %1863
    %v1869 = vsel %vm17, %v1825, %v1842
    %v1870 = vsel %vm17, %v1826, %v1844
    %v1871 = vsel %vm17, %v1827, %v1846
    %v1872 = vsel %vm17, %v1828, %v1848
    %v1873 = vsel %vm79, %v1869, %v1858
    %v1874 = vsel %vm79, %v1870, %v1860
    %v1875 = vsel %vm79, %v1871, %v1862
    %v1876 = vsel %vm79, %v1872, %v1864
    %v1877 = vpack.c.bf16 %v1874, %v1873
    %v1878 = vpack.c.bf16 %v1876, %v1875
    %s1879 = scalar_lea.vmem %s0, 192
    %v1880 = vld [vmem:[%s1879] sm:$0xff]
    %v1881 = vld [vmem:[%s1879 + $0x8] sm:$0xff]
    %v1882 = vld [vmem:[%s1879 + $0x10] sm:$0xff]
    %v1883 = vld [vmem:[%s1879 + $0x18] sm:$0xff]
    %v1884 = vld [vmem:[%s1] sm:$0xf]
    %v1885 = vld [vmem:[%s1 + $0x4] sm:$0xf]
    %v1886 = vld [vmem:[%s1 + $0x8] sm:$0xf]
    %v1887 = vld [vmem:[%s1 + $0xc] sm:$0xf]
    %v1888 = vld [vmem:[%s1 + $0x10] sm:$0xf]
    %v1889 = vld [vmem:[%s1 + $0x14] sm:$0xf]
    %v1890 = vld [vmem:[%s1 + $0x18] sm:$0xf]
    %v1891 = vld [vmem:[%s1 + $0x1c] sm:$0xf]
    %v1892 = vld [vmem:[%s1 + $0x20] sm:$0xf]
    %v1893 = vld [vmem:[%s1 + $0x24] sm:$0xf]
    %v1894 = vld [vmem:[%s1 + $0x28] sm:$0xf]
    %v1895 = vld [vmem:[%s1 + $0x2c] sm:$0xf]
    %v1908 = vunpack.c.l.b16 %v1884
    %v1909 = vunpack.c.l.b16 %v1885
    %v1910 = vunpack.c.l.b16 %v1886
    %v1911 = vunpack.c.l.b16 %v1887
    %v1912 = vunpack.c.l.b16 %v1888
    %v1913 = vunpack.c.l.b16 %v1889
    %v1914 = vunpack.c.l.b16 %v1890
    %v1915 = vunpack.c.l.b16 %v1891
    %v1916 = vunpack.c.l.b16 %v1892
    %v1917 = vunpack.c.l.b16 %v1893
    %v1918 = vunpack.c.l.b16 %v1894
    %v1919 = vunpack.c.l.b16 %v1895
    %v1920 = vpack.c.b16 %v1909, %v1908
    %v1921 = vpack.c.b16 %v1911, %v1910
    %v1922 = vpack.c.b16 %v1913, %v1912
    %v1923 = vpack.c.b16 %v1915, %v1914
    %v1924 = vpack.c.b16 %v1917, %v1916
    %v1925 = vpack.c.b16 %v1919, %v1918
    %v1933 = vsel %vm138, %v1877, 0
    %v1936 = vsel %vm138, %v1878, 0
    %1938 = vmatprep.subr.bf16.mxu0 0
    %1939 = vmatpush1.bf16.msra.mxu0 0
    %1940 = vmatprep.subr.bf16.mxu0 0
    %1941 = vmatpush1.bf16.msra.mxu0 0
    %1942 = vmatprep.subr.bf16.mxu0 0
    %1943 = vmatpush1.bf16.msra.mxu0 %v1925
    %1944 = vmatprep.subr.bf16.mxu0 0
    %1945 = vmatpush1.bf16.msra.mxu0 %v1924
    %1946 = vmatprep.subr.bf16.mxu0 0
    %1947 = vmatpush1.bf16.msra.mxu0 %v1923
    %1948 = vmatprep.subr.bf16.mxu0 0
    %1949 = vmatpush1.bf16.msra.mxu0 %v1922
    %1950 = vmatprep.subr.bf16.mxu0 0
    %1951 = vmatpush1.bf16.msra.mxu0 %v1921
    %1952 = vmatprep.subr.bf16.mxu0 0
    %1953 = vmatpush1.bf16.msra.mxu0 %v1920
    %1954 = vmatprep.subr.bf16.mxu0 0
    %1955 = vmatpush2.bf16.msra.mxu0 0
    %1956 = vmatprep.subr.bf16.mxu0 0
    %1957 = vmatpush2.bf16.msra.mxu0 0
    %1958 = vmatprep.subr.bf16.mxu0 0
    %1959 = vmatpush2.bf16.msra.mxu0 0
    %1960 = vmatprep.subr.bf16.mxu0 0
    %1961 = vmatpush2.bf16.msra.mxu0 0
    %1962 = vmatprep.subr.bf16.mxu0 0
    %1963 = vmatpush2.bf16.msra.mxu0 0
    %1964 = vmatprep.subr.bf16.mxu0 0
    %1965 = vmatpush2.bf16.msra.mxu0 0
    %1966 = vmatprep.subr.bf16.mxu0 0
    %1967 = vmatpush2.bf16.msra.mxu0 0
    %1968 = vmatprep.subr.bf16.mxu0 0
    %1969 = vmatpush2.bf16.msra.mxu0 0
    %1970 = vmatprep.mubr.bf16.mxu0 0
    %1971 = vmatmul.mubr.bf16.gmra.mxu0 %v1933
    %v1972 = vpop.f32.mrf.mxu0
    %v1973 = vadd.f32 0.0, %v1972
    %v1974 = vpop.f32.mrf.mxu0
    %v1975 = vpop.f32.mrf.mxu0
    %v1976 = vadd.f32 0.0, %v1975
    %v1977 = vpop.f32.mrf.mxu0
    %1978 = vmatprep.mubr.bf16.mxu0 0
    %1979 = vmatmul.mubr.bf16.gmra.mxu0 %v1936
    %v1980 = vpop.f32.mrf.mxu0
    %v1981 = vadd.f32 0.0, %v1980
    %v1982 = vpop.f32.mrf.mxu0
    %v1983 = vpop.f32.mrf.mxu0
    %v1984 = vadd.f32 0.0, %v1983
    %v1985 = vpop.f32.mrf.mxu0
    %1986 = vdwg.mxu0
    %v1987 = vadd.f32 %v1880, %v1973
    %v1988 = vadd.f32 %v1881, %v1976
    %v1989 = vadd.f32 %v1882, %v1981
    %v1990 = vadd.f32 %v1883, %v1984
    %v1991 = vmul.f32 %v1987, %v30
    %v1992 = vmul.f32 %v1988, %v30
    %v1993 = vmul.f32 %v1989, %v30
    %v1994 = vmul.f32 %v1990, %v30
    %v1995 = vxor.u32 %v1991, 2147483648
    %v1996 = vxor.u32 %v1992, 2147483648
    %v1997 = vxor.u32 %v1993, 2147483648
    %v1998 = vxor.u32 %v1994, 2147483648
    %v1999 = vmul.f32 %v1995, 1.442695
    %v2000 = vpow.pop %v1999
    %v2001 = vmul.f32 %v1996, 1.442695
    %v2002 = vpow.pop %v2001
    %v2003 = vmul.f32 %v1997, 1.442695
    %v2004 = vpow.pop %v2003
    %v2005 = vmul.f32 %v1998, 1.442695
    %v2006 = vpow.pop %v2005
    %v2007 = vadd.f32 %v2000, 1.0
    %v2008 = vadd.f32 %v2002, 1.0
    %v2009 = vadd.f32 %v2004, 1.0
    %v2010 = vadd.f32 %v2006, 1.0
    %v2011 = vrcp.pop %v2007
    %v2012 = vmul.f32 1.0, %v2011
    %v2013 = vrcp.pop %v2008
    %v2014 = vmul.f32 1.0, %v2013
    %v2015 = vrcp.pop %v2009
    %v2016 = vmul.f32 1.0, %v2015
    %v2017 = vrcp.pop %v2010
    %v2018 = vmul.f32 1.0, %v2017
    %v2019 = vadd.f32 %v2012, %v2012
    %v2020 = vadd.f32 %v2014, %v2014
    %v2021 = vadd.f32 %v2016, %v2016
    %v2022 = vadd.f32 %v2018, %v2018
    %v2023 = vsub.f32 %v2019, 1.0
    %v2024 = vsub.f32 %v2020, 1.0
    %v2025 = vsub.f32 %v2021, 1.0
    %v2026 = vsub.f32 %v2022, 1.0
    %v2027 = vsel %vm29, %v2023, %v2012
    %v2028 = vsel %vm29, %v2024, %v2014
    %v2029 = vsel %vm29, %v2025, %v2016
    %v2030 = vsel %vm29, %v2026, %v2018
    %v2031 = vmul.f32 %v2027, %v1772
    %v2032 = vmul.f32 %v2028, %v1773
    %v2033 = vmul.f32 %v2029, %v1774
    %v2034 = vmul.f32 %v2030, %v1775
    %2039 = vrot.lane.b32.xlu0 %v2027, 32
    %v2040 = vpop.permute.xlu0 %2039
    %2041 = vrot.lane.b32.xlu0 %v2028, 32
    %v2042 = vpop.permute.xlu0 %2041
    %2043 = vrot.lane.b32.xlu0 %v2029, 32
    %v2044 = vpop.permute.xlu0 %2043
    %2045 = vrot.lane.b32.xlu0 %v2030, 32
    %v2046 = vpop.permute.xlu0 %2045
    %v2051 = vmul.f32 %v2027, %v2040
    %v2052 = vmul.f32 %v2028, %v2042
    %v2053 = vmul.f32 %v2029, %v2044
    %v2054 = vmul.f32 %v2030, %v2046
    %2059 = vrot.lane.b32.xlu0 %v2051, 32
    %v2060 = vpop.permute.xlu0 %2059
    %2061 = vrot.lane.b32.xlu0 %v2052, 32
    %v2062 = vpop.permute.xlu0 %2061
    %2063 = vrot.lane.b32.xlu0 %v2053, 32
    %v2064 = vpop.permute.xlu0 %2063
    %2065 = vrot.lane.b32.xlu0 %v2054, 32
    %v2066 = vpop.permute.xlu0 %2065
    %v2071 = vadd.f32 %v2031, %v2060
    %v2072 = vadd.f32 %v2032, %v2062
    %v2073 = vadd.f32 %v2033, %v2064
    %v2074 = vadd.f32 %v2034, %v2066
    %v2075 = vtanh.pop %v2071
    %v2076 = vtanh.pop %v2072
    %v2077 = vtanh.pop %v2073
    %v2078 = vtanh.pop %v2074
    %2083 = vrot.lane.b32.xlu0 %v2075, 32
    %v2084 = vpop.permute.xlu0 %2083
    %2085 = vrot.lane.b32.xlu0 %v2076, 32
    %v2086 = vpop.permute.xlu0 %2085
    %2087 = vrot.lane.b32.xlu0 %v2077, 32
    %v2088 = vpop.permute.xlu0 %2087
    %2089 = vrot.lane.b32.xlu0 %v2078, 32
    %v2090 = vpop.permute.xlu0 %2089
    %v2095 = vmul.f32 %v2027, %v2084
    %v2096 = vmul.f32 %v2028, %v2086
    %v2097 = vmul.f32 %v2029, %v2088
    %v2098 = vmul.f32 %v2030, %v2090
    %2103 = vrot.lane.b32.xlu0 %v2095, 64
    %v2104 = vpop.permute.xlu0 %2103
    %2105 = vrot.lane.b32.xlu0 %v2096, 64
    %v2106 = vpop.permute.xlu0 %2105
    %2107 = vrot.lane.b32.xlu0 %v2097, 64
    %v2108 = vpop.permute.xlu0 %2107
    %2109 = vrot.lane.b32.xlu0 %v2098, 64
    %v2110 = vpop.permute.xlu0 %2109
    %2115 = vst.msk [vmem:[#allocation2 + $0x8] sm:$0xff] %vm17, %v2104
    %2116 = vst.msk [vmem:[#allocation2 + $0x10] sm:$0xff] %vm17, %v2106
    %2117 = vst.msk [vmem:[#allocation2 + $0x28] sm:$0xff] %vm17, %v2108
    %2118 = vst.msk [vmem:[#allocation2 + $0x30] sm:$0xff] %vm17, %v2110
    %s2119 = scalar_lea.vmem [#allocation3], 96
    %2120 = vst.msk [vmem:[%s2119] sm:$0xff] %vm17, %v2104
    %2121 = vst.msk [vmem:[%s2119 + $0x8] sm:$0xff] %vm17, %v2106
    %2122 = vst.msk [vmem:[%s2119 + $0x80] sm:$0xff] %vm17, %v2108
    %2123 = vst.msk [vmem:[%s2119 + $0x88] sm:$0xff] %vm17, %v2110
    %v2124 = vld [vmem:[#allocation2 + $0x7] sm:$0xff]
    %v2125 = vld [vmem:[#allocation2 + $0xf] sm:$0xff]
    %v2126 = vld [vmem:[#allocation2 + $0x27] sm:$0xff]
    %v2127 = vld [vmem:[#allocation2 + $0x2f] sm:$0xff]
    %v2128 = vld [vmem:[#allocation2 + $0x8] sm:$0xff]
    %v2129 = vld [vmem:[#allocation2 + $0x10] sm:$0xff]
    %v2130 = vld [vmem:[#allocation2 + $0x28] sm:$0xff]
    %v2131 = vld [vmem:[#allocation2 + $0x30] sm:$0xff]
    %v2132 = vld [vmem:[#allocation2 + $0x9] sm:$0xff]
    %v2133 = vld [vmem:[#allocation2 + $0x11] sm:$0xff]
    %v2134 = vld [vmem:[#allocation2 + $0x29] sm:$0xff]
    %v2135 = vld [vmem:[#allocation2 + $0x31] sm:$0xff]
    %2140 = vrot.lane.b32.xlu0 %v2128, 32
    %v2141 = vpop.permute.xlu0 %2140
    %2142 = vrot.lane.b32.xlu0 %v2129, 32
    %v2143 = vpop.permute.xlu0 %2142
    %2144 = vrot.lane.b32.xlu0 %v2130, 32
    %v2145 = vpop.permute.xlu0 %2144
    %2146 = vrot.lane.b32.xlu0 %v2131, 32
    %v2147 = vpop.permute.xlu0 %2146
    %2156 = vrot.lane.b32.xlu0 %v2132, 64
    %v2157 = vpop.permute.xlu0 %2156
    %2158 = vrot.lane.b32.xlu0 %v2133, 64
    %v2159 = vpop.permute.xlu0 %2158
    %2160 = vrot.lane.b32.xlu0 %v2134, 64
    %v2161 = vpop.permute.xlu0 %2160
    %2162 = vrot.lane.b32.xlu0 %v2135, 64
    %v2163 = vpop.permute.xlu0 %2162
    %v2168 = vsel %vm17, %v2124, %v2141
    %v2169 = vsel %vm17, %v2125, %v2143
    %v2170 = vsel %vm17, %v2126, %v2145
    %v2171 = vsel %vm17, %v2127, %v2147
    %v2172 = vsel %vm79, %v2168, %v2157
    %v2173 = vsel %vm79, %v2169, %v2159
    %v2174 = vsel %vm79, %v2170, %v2161
    %v2175 = vsel %vm79, %v2171, %v2163
    %v2176 = vpack.c.bf16 %v2173, %v2172
    %v2177 = vpack.c.bf16 %v2175, %v2174
    %s2178 = scalar_lea.vmem %s0, 224
    %v2179 = vld [vmem:[%s2178] sm:$0xff]
    %v2180 = vld [vmem:[%s2178 + $0x8] sm:$0xff]
    %v2181 = vld [vmem:[%s2178 + $0x10] sm:$0xff]
    %v2182 = vld [vmem:[%s2178 + $0x18] sm:$0xff]
    %v2183 = vld [vmem:[%s1] sm:$0xf]
    %v2184 = vld [vmem:[%s1 + $0x4] sm:$0xf]
    %v2185 = vld [vmem:[%s1 + $0x8] sm:$0xf]
    %v2186 = vld [vmem:[%s1 + $0xc] sm:$0xf]
    %v2187 = vld [vmem:[%s1 + $0x10] sm:$0xf]
    %v2188 = vld [vmem:[%s1 + $0x14] sm:$0xf]
    %v2189 = vld [vmem:[%s1 + $0x18] sm:$0xf]
    %v2190 = vld [vmem:[%s1 + $0x1c] sm:$0xf]
    %v2191 = vld [vmem:[%s1 + $0x20] sm:$0xf]
    %v2192 = vld [vmem:[%s1 + $0x24] sm:$0xf]
    %v2193 = vld [vmem:[%s1 + $0x28] sm:$0xf]
    %v2194 = vld [vmem:[%s1 + $0x2c] sm:$0xf]
    %v2207 = vunpack.c.l.b16 %v2183
    %v2208 = vunpack.c.l.b16 %v2184
    %v2209 = vunpack.c.l.b16 %v2185
    %v2210 = vunpack.c.l.b16 %v2186
    %v2211 = vunpack.c.l.b16 %v2187
    %v2212 = vunpack.c.l.b16 %v2188
    %v2213 = vunpack.c.l.b16 %v2189
    %v2214 = vunpack.c.l.b16 %v2190
    %v2215 = vunpack.c.l.b16 %v2191
    %v2216 = vunpack.c.l.b16 %v2192
    %v2217 = vunpack.c.l.b16 %v2193
    %v2218 = vunpack.c.l.b16 %v2194
    %v2219 = vpack.c.b16 %v2208, %v2207
    %v2220 = vpack.c.b16 %v2210, %v2209
    %v2221 = vpack.c.b16 %v2212, %v2211
    %v2222 = vpack.c.b16 %v2214, %v2213
    %v2223 = vpack.c.b16 %v2216, %v2215
    %v2224 = vpack.c.b16 %v2218, %v2217
    %v2232 = vsel %vm138, %v2176, 0
    %v2235 = vsel %vm138, %v2177, 0
    %2237 = vmatprep.subr.bf16.mxu0 0
    %2238 = vmatpush1.bf16.msra.mxu0 0
    %2239 = vmatprep.subr.bf16.mxu0 0
    %2240 = vmatpush1.bf16.msra.mxu0 0
    %2241 = vmatprep.subr.bf16.mxu0 0
    %2242 = vmatpush1.bf16.msra.mxu0 %v2224
    %2243 = vmatprep.subr.bf16.mxu0 0
    %2244 = vmatpush1.bf16.msra.mxu0 %v2223
    %2245 = vmatprep.subr.bf16.mxu0 0
    %2246 = vmatpush1.bf16.msra.mxu0 %v2222
    %2247 = vmatprep.subr.bf16.mxu0 0
    %2248 = vmatpush1.bf16.msra.mxu0 %v2221
    %2249 = vmatprep.subr.bf16.mxu0 0
    %2250 = vmatpush1.bf16.msra.mxu0 %v2220
    %2251 = vmatprep.subr.bf16.mxu0 0
    %2252 = vmatpush1.bf16.msra.mxu0 %v2219
    %2253 = vmatprep.subr.bf16.mxu0 0
    %2254 = vmatpush2.bf16.msra.mxu0 0
    %2255 = vmatprep.subr.bf16.mxu0 0
    %2256 = vmatpush2.bf16.msra.mxu0 0
    %2257 = vmatprep.subr.bf16.mxu0 0
    %2258 = vmatpush2.bf16.msra.mxu0 0
    %2259 = vmatprep.subr.bf16.mxu0 0
    %2260 = vmatpush2.bf16.msra.mxu0 0
    %2261 = vmatprep.subr.bf16.mxu0 0
    %2262 = vmatpush2.bf16.msra.mxu0 0
    %2263 = vmatprep.subr.bf16.mxu0 0
    %2264 = vmatpush2.bf16.msra.mxu0 0
    %2265 = vmatprep.subr.bf16.mxu0 0
    %2266 = vmatpush2.bf16.msra.mxu0 0
    %2267 = vmatprep.subr.bf16.mxu0 0
    %2268 = vmatpush2.bf16.msra.mxu0 0
    %2269 = vmatprep.mubr.bf16.mxu0 0
    %2270 = vmatmul.mubr.bf16.gmra.mxu0 %v2232
    %v2271 = vpop.f32.mrf.mxu0
    %v2272 = vadd.f32 0.0, %v2271
    %v2273 = vpop.f32.mrf.mxu0
    %v2274 = vpop.f32.mrf.mxu0
    %v2275 = vadd.f32 0.0, %v2274
    %v2276 = vpop.f32.mrf.mxu0
    %2277 = vmatprep.mubr.bf16.mxu0 0
    %2278 = vmatmul.mubr.bf16.gmra.mxu0 %v2235
    %v2279 = vpop.f32.mrf.mxu0
    %v2280 = vadd.f32 0.0, %v2279
    %v2281 = vpop.f32.mrf.mxu0
    %v2282 = vpop.f32.mrf.mxu0
    %v2283 = vadd.f32 0.0, %v2282
    %v2284 = vpop.f32.mrf.mxu0
    %2285 = vdwg.mxu0
    %v2286 = vadd.f32 %v2179, %v2272
    %v2287 = vadd.f32 %v2180, %v2275
    %v2288 = vadd.f32 %v2181, %v2280
    %v2289 = vadd.f32 %v2182, %v2283
    %v2290 = vmul.f32 %v2286, %v30
    %v2291 = vmul.f32 %v2287, %v30
    %v2292 = vmul.f32 %v2288, %v30
    %v2293 = vmul.f32 %v2289, %v30
    %v2294 = vxor.u32 %v2290, 2147483648
    %v2295 = vxor.u32 %v2291, 2147483648
    %v2296 = vxor.u32 %v2292, 2147483648
    %v2297 = vxor.u32 %v2293, 2147483648
    %v2298 = vmul.f32 %v2294, 1.442695
    %v2299 = vpow.pop %v2298
    %v2300 = vmul.f32 %v2295, 1.442695
    %v2301 = vpow.pop %v2300
    %v2302 = vmul.f32 %v2296, 1.442695
    %v2303 = vpow.pop %v2302
    %v2304 = vmul.f32 %v2297, 1.442695
    %v2305 = vpow.pop %v2304
    %v2306 = vadd.f32 %v2299, 1.0
    %v2307 = vadd.f32 %v2301, 1.0
    %v2308 = vadd.f32 %v2303, 1.0
    %v2309 = vadd.f32 %v2305, 1.0
    %v2310 = vrcp.pop %v2306
    %v2311 = vmul.f32 1.0, %v2310
    %v2312 = vrcp.pop %v2307
    %v2313 = vmul.f32 1.0, %v2312
    %v2314 = vrcp.pop %v2308
    %v2315 = vmul.f32 1.0, %v2314
    %v2316 = vrcp.pop %v2309
    %v2317 = vmul.f32 1.0, %v2316
    %v2318 = vadd.f32 %v2311, %v2311
    %v2319 = vadd.f32 %v2313, %v2313
    %v2320 = vadd.f32 %v2315, %v2315
    %v2321 = vadd.f32 %v2317, %v2317
    %v2322 = vsub.f32 %v2318, 1.0
    %v2323 = vsub.f32 %v2319, 1.0
    %v2324 = vsub.f32 %v2320, 1.0
    %v2325 = vsub.f32 %v2321, 1.0
    %v2326 = vsel %vm29, %v2322, %v2311
    %v2327 = vsel %vm29, %v2323, %v2313
    %v2328 = vsel %vm29, %v2324, %v2315
    %v2329 = vsel %vm29, %v2325, %v2317
    %v2330 = vmul.f32 %v2326, %v2071
    %v2331 = vmul.f32 %v2327, %v2072
    %v2332 = vmul.f32 %v2328, %v2073
    %v2333 = vmul.f32 %v2329, %v2074
    %2338 = vrot.lane.b32.xlu0 %v2326, 32
    %v2339 = vpop.permute.xlu0 %2338
    %2340 = vrot.lane.b32.xlu0 %v2327, 32
    %v2341 = vpop.permute.xlu0 %2340
    %2342 = vrot.lane.b32.xlu0 %v2328, 32
    %v2343 = vpop.permute.xlu0 %2342
    %2344 = vrot.lane.b32.xlu0 %v2329, 32
    %v2345 = vpop.permute.xlu0 %2344
    %v2350 = vmul.f32 %v2326, %v2339
    %v2351 = vmul.f32 %v2327, %v2341
    %v2352 = vmul.f32 %v2328, %v2343
    %v2353 = vmul.f32 %v2329, %v2345
    %2358 = vrot.lane.b32.xlu0 %v2350, 32
    %v2359 = vpop.permute.xlu0 %2358
    %2360 = vrot.lane.b32.xlu0 %v2351, 32
    %v2361 = vpop.permute.xlu0 %2360
    %2362 = vrot.lane.b32.xlu0 %v2352, 32
    %v2363 = vpop.permute.xlu0 %2362
    %2364 = vrot.lane.b32.xlu0 %v2353, 32
    %v2365 = vpop.permute.xlu0 %2364
    %v2370 = vadd.f32 %v2330, %v2359
    %v2371 = vadd.f32 %v2331, %v2361
    %v2372 = vadd.f32 %v2332, %v2363
    %v2373 = vadd.f32 %v2333, %v2365
    %v2374 = vtanh.pop %v2370
    %v2375 = vtanh.pop %v2371
    %v2376 = vtanh.pop %v2372
    %v2377 = vtanh.pop %v2373
    %2382 = vrot.lane.b32.xlu0 %v2374, 32
    %v2383 = vpop.permute.xlu0 %2382
    %2384 = vrot.lane.b32.xlu0 %v2375, 32
    %v2385 = vpop.permute.xlu0 %2384
    %2386 = vrot.lane.b32.xlu0 %v2376, 32
    %v2387 = vpop.permute.xlu0 %2386
    %2388 = vrot.lane.b32.xlu0 %v2377, 32
    %v2389 = vpop.permute.xlu0 %2388
    %v2394 = vmul.f32 %v2326, %v2383
    %v2395 = vmul.f32 %v2327, %v2385
    %v2396 = vmul.f32 %v2328, %v2387
    %v2397 = vmul.f32 %v2329, %v2389
    %2402 = vrot.lane.b32.xlu0 %v2394, 64
    %v2403 = vpop.permute.xlu0 %2402
    %2404 = vrot.lane.b32.xlu0 %v2395, 64
    %v2405 = vpop.permute.xlu0 %2404
    %2406 = vrot.lane.b32.xlu0 %v2396, 64
    %v2407 = vpop.permute.xlu0 %2406
    %2408 = vrot.lane.b32.xlu0 %v2397, 64
    %v2409 = vpop.permute.xlu0 %2408
    %2414 = vst.msk [vmem:[#allocation2 + $0x8] sm:$0xff] %vm17, %v2403
    %2415 = vst.msk [vmem:[#allocation2 + $0x10] sm:$0xff] %vm17, %v2405
    %2416 = vst.msk [vmem:[#allocation2 + $0x28] sm:$0xff] %vm17, %v2407
    %2417 = vst.msk [vmem:[#allocation2 + $0x30] sm:$0xff] %vm17, %v2409
    %s2418 = scalar_lea.vmem [#allocation3], 112
    %2419 = vst.msk [vmem:[%s2418] sm:$0xff] %vm17, %v2403
    %2420 = vst.msk [vmem:[%s2418 + $0x8] sm:$0xff] %vm17, %v2405
    %2421 = vst.msk [vmem:[%s2418 + $0x80] sm:$0xff] %vm17, %v2407
    %2422 = vst.msk [vmem:[%s2418 + $0x88] sm:$0xff] %vm17, %v2409
    %v2423 = vld [vmem:[#allocation2 + $0x8] sm:$0xff]
    %v2424 = vld [vmem:[#allocation2 + $0x10] sm:$0xff]
    %v2425 = vld [vmem:[#allocation2 + $0x28] sm:$0xff]
    %v2426 = vld [vmem:[#allocation2 + $0x30] sm:$0xff]
    %2427 = vst.msk [vmem:[#allocation5] sm:$0xff] %vm17, %v2423
    %2428 = vst.msk [vmem:[#allocation5 + $0x8] sm:$0xff] %vm17, %v2424
    %2429 = vst.msk [vmem:[#allocation5 + $0x10] sm:$0xff] %vm17, %v2425
    %2430 = vst.msk [vmem:[#allocation5 + $0x18] sm:$0xff] %vm17, %v2426
    %2435 = vrot.lane.b32.xlu0 %v2370, 96
    %v2436 = vpop.permute.xlu0 %2435
    %2437 = vrot.lane.b32.xlu0 %v2371, 96
    %v2438 = vpop.permute.xlu0 %2437
    %2439 = vrot.lane.b32.xlu0 %v2372, 96
    %v2440 = vpop.permute.xlu0 %2439
    %2441 = vrot.lane.b32.xlu0 %v2373, 96
    %v2442 = vpop.permute.xlu0 %2441
    %2447 = vst.msk [vmem:[#allocation7] sm:$0xff] %vm17, %v2436
    %2448 = vst.msk [vmem:[#allocation7 + $0x8] sm:$0xff] %vm17, %v2438
    %2449 = vst.msk [vmem:[#allocation7 + $0x10] sm:$0xff] %vm17, %v2440
    %2450 = vst.msk [vmem:[#allocation7 + $0x18] sm:$0xff] %vm17, %v2442
    // Predicated region
    $region10: #{conv_lstm_pallas.1} parent=1 // pred_check
      _
    $region11: #{conv_lstm_pallas.1} parent=1 // pred_check_branch
      %2452 = sbr.rel (0) target = $region13
    $region12: #{conv_lstm_pallas.1} parent=1 // pred_region
      %s2454 = ssub.s32 4096, 4096
      %2455 = vsyncadd [#allocation4], %s2454
      %s2456 = sshll.u32 [#allocation3], 4
      %s2457 = int_to_ptr.vmem [resolvable:$true] %s2456
      %2462 = dma.vmem_to_hbm [thread:$0]  %s2457, 4096, %s2, [#allocation4], 128, 128, 8
    $region13: #{conv_lstm_pallas.1} parent=1 // pred_fallthru
      _
    // Predicated region
    $region14: #{conv_lstm_pallas.1} parent=1 // pred_check
      _
    $region15: #{conv_lstm_pallas.1} parent=1 // pred_check_branch
      %2464 = sbr.rel (0) target = $region17
    $region16: #{conv_lstm_pallas.1} parent=1 // pred_region
      %s2466 = ssub.s32 512, 512
      %2467 = vsyncadd [#allocation6], %s2466
      %s2468 = sshll.u32 [#allocation5], 4
      %s2469 = int_to_ptr.vmem [resolvable:$true] %s2468
      %2474 = dma.vmem_to_hbm [thread:$0]  %s2469, 512, %s3, [#allocation6], 128, 128, 8
    $region17: #{conv_lstm_pallas.1} parent=1 // pred_fallthru
      _
    // Predicated region
    $region18: #{conv_lstm_pallas.1} parent=1 // pred_check
      _
    $region19: #{conv_lstm_pallas.1} parent=1 // pred_check_branch
      %2476 = sbr.rel (0) target = $region21
    $region20: #{conv_lstm_pallas.1} parent=1 // pred_region
      %s2478 = ssub.s32 512, 512
      %2479 = vsyncadd [#allocation6], %s2478
      %s2480 = sshll.u32 [#allocation7], 4
      %s2481 = int_to_ptr.vmem [resolvable:$true] %s2480
      %2486 = dma.vmem_to_hbm [thread:$0]  %s2481, 512, %s4, [#allocation6], 128, 128, 8
    $region21: #{conv_lstm_pallas.1} parent=1 // pred_fallthru
      _
    // Predicated region
    $region22: #{conv_lstm_pallas.1} parent=1 // pred_check
      _
    $region23: #{conv_lstm_pallas.1} parent=1 // pred_check_branch
      %2488 = sbr.rel (0) target = $region25
    $region24: #{conv_lstm_pallas.1} parent=1 // pred_region
      %2489 = dma.done [#allocation4], 4096
    $region25: #{conv_lstm_pallas.1} parent=1 // pred_fallthru
      _
    // Predicated region
    $region26: #{conv_lstm_pallas.1} parent=1 // pred_check
      _
    $region27: #{conv_lstm_pallas.1} parent=1 // pred_check_branch
      %2491 = sbr.rel (0) target = $region29
    $region28: #{conv_lstm_pallas.1} parent=1 // pred_region
      %2492 = dma.done [#allocation6], 512
    $region29: #{conv_lstm_pallas.1} parent=1 // pred_fallthru
      _
    // Predicated region
    $region30: #{conv_lstm_pallas.1} parent=1 // pred_check
      _
    $region31: #{conv_lstm_pallas.1} parent=1 // pred_check_branch
      %2494 = sbr.rel (0) target = $region33
    $region32: #{conv_lstm_pallas.1} parent=1 // pred_region
      %2495 = dma.done [#allocation6], 512
    $region33: #{conv_lstm_pallas.1} parent=1 // pred_fallthru
      _
    %2496 = vsyncpa [#allocation4], 1
    %2497 = vsyncpa [#allocation6], 1

</llo_original>
